<compile_context>
chip_gen: v7x
topology: tpu7x:2x2x1
jax: 0.10.0
libtpu: 0.0.40
codegen_flags: <defaults>
</compile_context>

<pallas_src>
import functools

import jax
import jax.numpy as jnp
from jax import lax
from jax.experimental import pallas as pl
from jax.experimental.pallas import tpu as pltpu


# ----------------------------------------------------------------------------
# Tiled linear (matmul) kernels
# ----------------------------------------------------------------------------

def _matmul_kernel(x_ref, w_ref, o_ref, acc_ref):
    @pl.when(pl.program_id(2) == 0)
    def _():
        acc_ref[...] = jnp.zeros_like(acc_ref)

    acc_ref[...] += jnp.dot(
        x_ref[...], w_ref[...], preferred_element_type=jnp.float32
    )

    @pl.when(pl.program_id(2) == pl.num_programs(2) - 1)
    def _():
        o_ref[...] = acc_ref[...].astype(o_ref.dtype)


def _matmul_bias_kernel(x_ref, w_ref, b_ref, o_ref, acc_ref):
    @pl.when(pl.program_id(2) == 0)
    def _():
        acc_ref[...] = jnp.zeros_like(acc_ref)

    acc_ref[...] += jnp.dot(
        x_ref[...], w_ref[...], preferred_element_type=jnp.float32
    )

    @pl.when(pl.program_id(2) == pl.num_programs(2) - 1)
    def _():
        o_ref[...] = (acc_ref[...] + b_ref[...].astype(jnp.float32)).astype(
            o_ref.dtype
        )


def _pick_tile(dim, target, align):
    """Largest multiple of `align` that divides `dim` and is <= target,
    else the full dim (full-extent blocks are always legal)."""
    t = min(target, dim)
    t -= t % align
    while t >= align:
        if dim % t == 0:
            return t
        t -= align
    return dim


def pallas_linear(x2d, w_t, bias=None, *, tm=256, tn=256, tk=512):
    """x2d: [M, K], w_t: [K, N] (pre-transposed), bias: [1, N] or None -> [M, N]."""
    M, K = x2d.shape
    Kw, N = w_t.shape
    assert K == Kw
    tm = _pick_tile(M, tm, 8)
    tn = _pick_tile(N, tn, 128)
    tk = _pick_tile(K, tk, 128)
    grid = (M // tm, N // tn, K // tk)

    x_spec = pl.BlockSpec((tm, tk), lambda i, j, k: (i, k))
    w_spec = pl.BlockSpec((tk, tn), lambda i, j, k: (k, j))
    o_spec = pl.BlockSpec((tm, tn), lambda i, j, k: (i, j))
    out_shape = jax.ShapeDtypeStruct((M, N), x2d.dtype)
    scratch = [pltpu.VMEM((tm, tn), jnp.float32)]
    cparams = pltpu.CompilerParams(
        dimension_semantics=("parallel", "parallel", "arbitrary")
    )

    if bias is None:
        return pl.pallas_call(
            _matmul_kernel,
            out_shape=out_shape,
            grid_spec=pltpu.PrefetchScalarGridSpec(
                num_scalar_prefetch=0,
                grid=grid,
                in_specs=[x_spec, w_spec],
                out_specs=o_spec,
                scratch_shapes=scratch,
            ),
            compiler_params=cparams,
        )(x2d, w_t)

    b_spec = pl.BlockSpec((1, tn), lambda i, j, k: (0, j))
    return pl.pallas_call(
        _matmul_bias_kernel,
        out_shape=out_shape,
        grid_spec=pltpu.PrefetchScalarGridSpec(
            num_scalar_prefetch=0,
            grid=grid,
            in_specs=[x_spec, w_spec, b_spec],
            out_specs=o_spec,
            scratch_shapes=scratch,
        ),
        compiler_params=cparams,
    )(x2d, w_t, bias)


# ----------------------------------------------------------------------------
# Multi-head attention kernel (head-batched, fused KV input)
# ----------------------------------------------------------------------------

def _attention_kernel(q_ref, kv_ref, o_ref, *, hb, dim_head, scale):
    # q block : [1, Nq, hb*dh]   (heads packed on the lane axis)
    # kv block: [1, Nk, hb*2*dh] (per-head interleaved [k_h | v_h])
    q = q_ref[0].astype(jnp.float32) * scale   # scale folded into q (Nq x D, not Nq x Nk)
    kv = kv_ref[0]

    outs = []
    for i in range(hb):  # small, fully unrolled head loop within one grid step
        q_h = q[:, i * dim_head:(i + 1) * dim_head]
        k_h = kv[:, (2 * i) * dim_head:(2 * i + 1) * dim_head].astype(jnp.float32)
        v_h = kv[:, (2 * i + 1) * dim_head:(2 * i + 2) * dim_head]

        # sim = q_h @ k_h^T without an explicit transpose (contract last dims).
        sim = lax.dot_general(
            q_h, k_h,
            dimension_numbers=(((1,), (1,)), ((), ())),
            preferred_element_type=jnp.float32,
        )                                             # [Nq, Nk]

        # numerically-stable softmax along the key axis
        m = jnp.max(sim, axis=-1, keepdims=True)
        p = jnp.exp(sim - m)
        denom = jnp.sum(p, axis=-1, keepdims=True)
        p = p * pl.reciprocal(denom, approx=True)     # EUP slot, ~free

        outs.append(
            jnp.dot(p.astype(v_h.dtype), v_h, preferred_element_type=jnp.float32)
        )

    # single lane-dense store of the whole head block: [Nq, hb*dh]
    o_ref[0] = jnp.concatenate(outs, axis=-1).astype(o_ref.dtype)


def _pick_head_block(heads, dim_head, max_hb=8):
    # Prefer a head block whose channel width is a multiple of 128 (lane-dense
    # blocks / stores); otherwise fall back to all heads per step (block spans
    # the full inner dim, which is always a legal block shape).
    for hb in range(min(max_hb, heads), 0, -1):
        if heads % hb == 0 and (hb * dim_head) % 128 == 0:
            return hb
    return heads


def pallas_attention(q, kv, *, heads, dim_head, scale):
    """q: [B, Nq, heads*dh], kv: [B, Nk, heads*2*dh] -> [B, Nq, heads*dh]."""
    B, Nq, inner_dim = q.shape
    _, Nk, kv_dim = kv.shape
    assert inner_dim == heads * dim_head and kv_dim == 2 * inner_dim

    hb = _pick_head_block(heads, dim_head)
    n_hblk = heads // hb
    qd = hb * dim_head
    kvd = 2 * qd

    kernel = functools.partial(
        _attention_kernel, hb=hb, dim_head=dim_head, scale=scale
    )
    return pl.pallas_call(
        kernel,
        out_shape=jax.ShapeDtypeStruct((B, Nq, inner_dim), q.dtype),
        grid=(B, n_hblk),
        in_specs=[
            pl.BlockSpec((1, Nq, qd), lambda b, h: (b, 0, h)),
            pl.BlockSpec((1, Nk, kvd), lambda b, h: (b, 0, h)),
        ],
        out_specs=pl.BlockSpec((1, Nq, qd), lambda b, h: (b, 0, h)),
        compiler_params=pltpu.CompilerParams(
            dimension_semantics=("parallel", "parallel")
        ),
    )(q, kv)


# ----------------------------------------------------------------------------
# CrossAttention forward (no head split/merge transposes outside Pallas)
# ----------------------------------------------------------------------------

def cross_attention_forward(params, x, context, heads):
    """x: [B, Nq, query_dim], context: [B, Nk, context_dim]."""
    B, Nq, query_dim = x.shape
    _, Nk, context_dim = context.shape
    inner_dim = params["w_q"].shape[1]          # heads * dim_head
    dim_head = inner_dim // heads
    scale = dim_head ** (-0.5)

    # --- projections (tiled Pallas matmuls); K and V fused into one matmul ---
    q = pallas_linear(x.reshape(B * Nq, query_dim), params["w_q"])
    q = q.reshape(B, Nq, inner_dim)
    kv = pallas_linear(context.reshape(B * Nk, context_dim), params["w_kv"])
    kv = kv.reshape(B, Nk, 2 * inner_dim)       # per-head interleaved [k_h | v_h]

    # --- attention hot path (head-batched Pallas kernel) ---
    out = pallas_attention(q, kv, heads=heads, dim_head=dim_head, scale=scale)

    # --- output projection + bias; dropout = identity (eval mode) ---
    out = pallas_linear(out.reshape(B * Nq, inner_dim),
                        params["w_out"], params["b_out"])
    return out.reshape(B, Nq, query_dim)


# ----------------------------------------------------------------------------
# Deterministic parameter init (shapes from CrossAttention.__init__)
# ----------------------------------------------------------------------------

def init_params(key, query_dim, context_dim, heads, dim_head, dtype=jnp.float32):
    inner_dim = heads * dim_head
    k1, k2, k3, k4, k5 = jax.random.split(key, 5)

    def uniform(k, shape, fan_in):
        bound = 1.0 / (fan_in ** 0.5)
        return jax.random.uniform(k, shape, dtype, -bound, bound)

    # Weights stored pre-transposed as [in, out] so kernels do x @ W directly.
    w_q = uniform(k1, (query_dim, inner_dim), query_dim)
    w_k = uniform(k2, (context_dim, inner_dim), context_dim)
    w_v = uniform(k3, (context_dim, inner_dim), context_dim)
    w_out = uniform(k4, (inner_dim, query_dim), inner_dim)
    b_out = uniform(k5, (1, query_dim), inner_dim)

    # Fused KV weight, per-head interleaved columns: [k_h0 | v_h0 | k_h1 | ...]
    wk_h = w_k.reshape(context_dim, heads, dim_head)
    wv_h = w_v.reshape(context_dim, heads, dim_head)
    w_kv = jnp.stack([wk_h, wv_h], axis=2).reshape(context_dim, 2 * inner_dim)

    return {
        "w_q": w_q, "w_k": w_k, "w_v": w_v, "w_kv": w_kv,
        "w_out": w_out, "b_out": b_out,
    }


# ----------------------------------------------------------------------------
# Reference (pure jnp) for sanity check
# ----------------------------------------------------------------------------

def reference_forward(params, x, context, heads):
    B, Nq, _ = x.shape
    _, Nk, _ = context.shape
    inner_dim = params["w_q"].shape[1]
    dim_head = inner_dim // heads
    scale = dim_head ** (-0.5)

    q = x @ params["w_q"]
    k = context @ params["w_k"]
    v = context @ params["w_v"]

    def split(t, n):
        return jnp.transpose(t.reshape(B, n, heads, dim_head), (0, 2, 1, 3))

    q, k, v = split(q, Nq), split(k, Nk), split(v, Nk)
    sim = jnp.einsum("bhid,bhjd->bhij", q, k) * scale
    p = jax.nn.softmax(sim, axis=-1)
    out = jnp.einsum("bhij,bhjd->bhid", p, v)
    out = jnp.transpose(out, (0, 2, 1, 3)).reshape(B, Nq, inner_dim)
    return out @ params["w_out"] + params["b_out"][0]


# ----------------------------------------------------------------------------

if __name__ == "__main__":
    B, Nq, Nk = 2, 16, 8
    query_dim, context_dim = 32, 24
    heads, dim_head = 4, 16

    key = jax.random.PRNGKey(0)
    kp, kx, kc = jax.random.split(key, 3)

    params = init_params(kp, query_dim, context_dim, heads, dim_head)
    x = jax.random.normal(kx, (B, Nq, query_dim), jnp.float32)
    context = jax.random.normal(kc, (B, Nk, context_dim), jnp.float32)

    fwd = jax.jit(functools.partial(cross_attention_forward, heads=heads))
    out = jax.block_until_ready(fwd(params, x, context))

    ref = reference_forward(params, x, context, heads)
    assert out.shape == (B, Nq, query_dim)
    # approx=True reciprocal trades a tiny softmax precision for the EUP slot;
    # tolerance is loose enough for that yet catches any layout/indexing bug.
    assert jnp.allclose(out, ref, atol=5e-3, rtol=5e-3), "mismatch vs reference"

    print("KERNEL_OK")
</pallas_src>

<mosaic_0001>
module attributes {stable_mosaic.version = 11 : i64} {
  func.func @_matmul_kernel(%arg0: i32, %arg1: i32, %arg2: i32, %arg3: memref<32x32xf32, #tpu.memory_space<vmem>>, %arg4: memref<32x64xf32, #tpu.memory_space<vmem>>, %arg5: memref<32x64xf32, #tpu.memory_space<vmem>>, %arg6: memref<32x64xf32, #tpu.memory_space<vmem>>) attributes {dimension_semantics = [#tpu.dimension_semantics<parallel>, #tpu.dimension_semantics<parallel>, #tpu.dimension_semantics<arbitrary>], iteration_bounds = array<i64: 1, 1, 1>, scalar_prefetch = 0 : i64, scratch_operands = 1 : i64, tpu.core_type = #tpu.core_type<tc>, window_params = [{transform_indices = @transform_0, window_bounds = array<i64: 32, 32>}, {transform_indices = @transform_1, window_bounds = array<i64: 32, 64>}, {transform_indices = @transform_2, window_bounds = array<i64: 32, 64>}]} {
    %c0_i32 = arith.constant 0 : i32
    %0 = arith.cmpi eq, %arg2, %c0_i32 : i32
    %1 = arith.extui %0 : i1 to i32
    %c0_i32_0 = arith.constant 0 : i32
    %2 = arith.cmpi ne, %1, %c0_i32_0 : i32
    scf.if %2 {
      %cst_10 = arith.constant 0.000000e+00 : f32
      %12 = vector.broadcast %cst_10 : f32 to vector<32x64xf32>
      %c0_11 = arith.constant 0 : index
      %c0_12 = arith.constant 0 : index
      %13 = vector.load %arg6[%c0_11, %c0_12] : memref<32x64xf32, #tpu.memory_space<vmem>>, vector<32x64xf32>
      tpu.vector_store %arg6[%c0_11, %c0_12], %12 {strides = array<i32>} : memref<32x64xf32, #tpu.memory_space<vmem>>, vector<32x64xf32>,
    } else {
    }
    %c0 = arith.constant 0 : index
    %c0_1 = arith.constant 0 : index
    %3 = vector.load %arg6[%c0, %c0_1] : memref<32x64xf32, #tpu.memory_space<vmem>>, vector<32x64xf32>
    %c0_2 = arith.constant 0 : index
    %c0_3 = arith.constant 0 : index
    %4 = vector.load %arg3[%c0_2, %c0_3] : memref<32x32xf32, #tpu.memory_space<vmem>>, vector<32x32xf32>
    %c0_4 = arith.constant 0 : index
    %c0_5 = arith.constant 0 : index
    %5 = vector.load %arg4[%c0_4, %c0_5] : memref<32x64xf32, #tpu.memory_space<vmem>>, vector<32x64xf32>
    %cst = arith.constant dense<0.000000e+00> : vector<32x64xf32>
    %6 = tpu.matmul %4, %5, %cst {dimension_numbers = #tpu.dot_dimension_numbers<[1], [0], [0], [1], [0, 0, 1, 1], [], []>} : vector<32x32xf32>, vector<32x64xf32>, vector<32x64xf32> -> vector<32x64xf32>
    %7 = arith.addf %3, %6 : vector<32x64xf32>
    %c0_6 = arith.constant 0 : index
    %c0_7 = arith.constant 0 : index
    %8 = vector.load %arg6[%c0_6, %c0_7] : memref<32x64xf32, #tpu.memory_space<vmem>>, vector<32x64xf32>
    tpu.vector_store %arg6[%c0_6, %c0_7], %7 {strides = array<i32>} : memref<32x64xf32, #tpu.memory_space<vmem>>, vector<32x64xf32>,
    %c0_i32_8 = arith.constant 0 : i32
    %9 = arith.cmpi eq, %arg2, %c0_i32_8 : i32
    %10 = arith.extui %9 : i1 to i32
    %c0_i32_9 = arith.constant 0 : i32
    %11 = arith.cmpi ne, %10, %c0_i32_9 : i32
    scf.if %11 {
      %c0_10 = arith.constant 0 : index
      %c0_11 = arith.constant 0 : index
      %12 = vector.load %arg6[%c0_10, %c0_11] : memref<32x64xf32, #tpu.memory_space<vmem>>, vector<32x64xf32>
      %c0_12 = arith.constant 0 : index
      %c0_13 = arith.constant 0 : index
      %13 = vector.load %arg5[%c0_12, %c0_13] : memref<32x64xf32, #tpu.memory_space<vmem>>, vector<32x64xf32>
      tpu.vector_store %arg5[%c0_12, %c0_13], %12 {strides = array<i32>} : memref<32x64xf32, #tpu.memory_space<vmem>>, vector<32x64xf32>,
    } else {
    }
    return
  }
  func.func @transform_0(%arg0: i32, %arg1: i32, %arg2: i32) -> (i32, i32) {
    %c0_i32 = arith.constant 0 : i32
    return %arg0, %arg2 : i32, i32
  }
  func.func @transform_1(%arg0: i32, %arg1: i32, %arg2: i32) -> (i32, i32) {
    %c0_i32 = arith.constant 0 : i32
    return %arg2, %arg1 : i32, i32
  }
  func.func @transform_2(%arg0: i32, %arg1: i32, %arg2: i32) -> (i32, i32) {
    %c0_i32 = arith.constant 0 : i32
    return %arg0, %arg1 : i32, i32
  }
}

module attributes {stable_mosaic.version = 11 : i64} {
  func.func @_matmul_kernel(%arg0: i32, %arg1: i32, %arg2: i32, %arg3: memref<16x24xf32, #tpu.memory_space<vmem>>, %arg4: memref<24x128xf32, #tpu.memory_space<vmem>>, %arg5: memref<16x128xf32, #tpu.memory_space<vmem>>, %arg6: memref<16x128xf32, #tpu.memory_space<vmem>>) attributes {dimension_semantics = [#tpu.dimension_semantics<parallel>, #tpu.dimension_semantics<parallel>, #tpu.dimension_semantics<arbitrary>], iteration_bounds = array<i64: 1, 1, 1>, scalar_prefetch = 0 : i64, scratch_operands = 1 : i64, tpu.core_type = #tpu.core_type<tc>, window_params = [{transform_indices = @transform_0, window_bounds = array<i64: 16, 24>}, {transform_indices = @transform_1, window_bounds = array<i64: 24, 128>}, {transform_indices = @transform_2, window_bounds = array<i64: 16, 128>}]} {
    %c0_i32 = arith.constant 0 : i32
    %0 = arith.cmpi eq, %arg2, %c0_i32 : i32
    %1 = arith.extui %0 : i1 to i32
    %c0_i32_0 = arith.constant 0 : i32
    %2 = arith.cmpi ne, %1, %c0_i32_0 : i32
    scf.if %2 {
      %cst_10 = arith.constant 0.000000e+00 : f32
      %12 = vector.broadcast %cst_10 : f32 to vector<16x128xf32>
      %c0_11 = arith.constant 0 : index
      %c0_12 = arith.constant 0 : index
      %13 = vector.load %arg6[%c0_11, %c0_12] : memref<16x128xf32, #tpu.memory_space<vmem>>, vector<16x128xf32>
      tpu.vector_store %arg6[%c0_11, %c0_12], %12 {strides = array<i32>} : memref<16x128xf32, #tpu.memory_space<vmem>>, vector<16x128xf32>,
    } else {
    }
    %c0 = arith.constant 0 : index
    %c0_1 = arith.constant 0 : index
    %3 = vector.load %arg6[%c0, %c0_1] : memref<16x128xf32, #tpu.memory_space<vmem>>, vector<16x128xf32>
    %c0_2 = arith.constant 0 : index
    %c0_3 = arith.constant 0 : index
    %4 = vector.load %arg3[%c0_2, %c0_3] : memref<16x24xf32, #tpu.memory_space<vmem>>, vector<16x24xf32>
    %c0_4 = arith.constant 0 : index
    %c0_5 = arith.constant 0 : index
    %5 = vector.load %arg4[%c0_4, %c0_5] : memref<24x128xf32, #tpu.memory_space<vmem>>, vector<24x128xf32>
    %cst = arith.constant dense<0.000000e+00> : vector<16x128xf32>
    %6 = tpu.matmul %4, %5, %cst {dimension_numbers = #tpu.dot_dimension_numbers<[1], [0], [0], [1], [0, 0, 1, 1], [], []>} : vector<16x24xf32>, vector<24x128xf32>, vector<16x128xf32> -> vector<16x128xf32>
    %7 = arith.addf %3, %6 : vector<16x128xf32>
    %c0_6 = arith.constant 0 : index
    %c0_7 = arith.constant 0 : index
    %8 = vector.load %arg6[%c0_6, %c0_7] : memref<16x128xf32, #tpu.memory_space<vmem>>, vector<16x128xf32>
    tpu.vector_store %arg6[%c0_6, %c0_7], %7 {strides = array<i32>} : memref<16x128xf32, #tpu.memory_space<vmem>>, vector<16x128xf32>,
    %c0_i32_8 = arith.constant 0 : i32
    %9 = arith.cmpi eq, %arg2, %c0_i32_8 : i32
    %10 = arith.extui %9 : i1 to i32
    %c0_i32_9 = arith.constant 0 : i32
    %11 = arith.cmpi ne, %10, %c0_i32_9 : i32
    scf.if %11 {
      %c0_10 = arith.constant 0 : index
      %c0_11 = arith.constant 0 : index
      %12 = vector.load %arg6[%c0_10, %c0_11] : memref<16x128xf32, #tpu.memory_space<vmem>>, vector<16x128xf32>
      %c0_12 = arith.constant 0 : index
      %c0_13 = arith.constant 0 : index
      %13 = vector.load %arg5[%c0_12, %c0_13] : memref<16x128xf32, #tpu.memory_space<vmem>>, vector<16x128xf32>
      tpu.vector_store %arg5[%c0_12, %c0_13], %12 {strides = array<i32>} : memref<16x128xf32, #tpu.memory_space<vmem>>, vector<16x128xf32>,
    } else {
    }
    return
  }
  func.func @transform_0(%arg0: i32, %arg1: i32, %arg2: i32) -> (i32, i32) {
    %c0_i32 = arith.constant 0 : i32
    return %arg0, %arg2 : i32, i32
  }
  func.func @transform_1(%arg0: i32, %arg1: i32, %arg2: i32) -> (i32, i32) {
    %c0_i32 = arith.constant 0 : i32
    return %arg2, %arg1 : i32, i32
  }
  func.func @transform_2(%arg0: i32, %arg1: i32, %arg2: i32) -> (i32, i32) {
    %c0_i32 = arith.constant 0 : i32
    return %arg0, %arg1 : i32, i32
  }
}

module attributes {stable_mosaic.version = 11 : i64} {
  func.func @_attention_kernel(%arg0: i32, %arg1: i32, %arg2: memref<1x16x64xf32, #tpu.memory_space<vmem>>, %arg3: memref<1x8x128xf32, #tpu.memory_space<vmem>>, %arg4: memref<1x16x64xf32, #tpu.memory_space<vmem>>) attributes {dimension_semantics = [#tpu.dimension_semantics<parallel>, #tpu.dimension_semantics<parallel>], iteration_bounds = array<i64: 2, 1>, scalar_prefetch = 0 : i64, scratch_operands = 0 : i64, tpu.core_type = #tpu.core_type<tc>, window_params = [{transform_indices = @transform_0, window_bounds = array<i64: 1, 16, 64>}, {transform_indices = @transform_1, window_bounds = array<i64: 1, 8, 128>}, {transform_indices = @transform_2, window_bounds = array<i64: 1, 16, 64>}]} {
    %c0 = arith.constant 0 : index
    %c0_0 = arith.constant 0 : index
    %c0_1 = arith.constant 0 : index
    %0 = vector.load %arg2[%c0, %c0_0, %c0_1] : memref<1x16x64xf32, #tpu.memory_space<vmem>>, vector<1x16x64xf32>
    %1 = vector.shape_cast %0 : vector<1x16x64xf32> to vector<16x64xf32>
    %cst = arith.constant 2.500000e-01 : f32
    %2 = vector.broadcast %cst : f32 to vector<16x64xf32>
    %3 = arith.mulf %1, %2 : vector<16x64xf32>
    %c0_2 = arith.constant 0 : index
    %c0_3 = arith.constant 0 : index
    %c0_4 = arith.constant 0 : index
    %4 = vector.load %arg3[%c0_2, %c0_3, %c0_4] : memref<1x8x128xf32, #tpu.memory_space<vmem>>, vector<1x8x128xf32>
    %5 = vector.shape_cast %4 : vector<1x8x128xf32> to vector<8x128xf32>
    %6 = vector.extract_strided_slice %3 {offsets = [0, 0], sizes = [16, 16], strides = [1, 1]} : vector<16x64xf32> to vector<16x16xf32>
    %7 = vector.extract_strided_slice %5 {offsets = [0, 0], sizes = [8, 16], strides = [1, 1]} : vector<8x128xf32> to vector<8x16xf32>
    %8 = vector.extract_strided_slice %5 {offsets = [0, 16], sizes = [8, 16], strides = [1, 1]} : vector<8x128xf32> to vector<8x16xf32>
    %cst_5 = arith.constant dense<0.000000e+00> : vector<16x8xf32>
    %9 = tpu.matmul %6, %7, %cst_5 {dimension_numbers = #tpu.dot_dimension_numbers<[1], [1], [0], [0], [0, 0, 1, 0], [], []>} : vector<16x16xf32>, vector<8x16xf32>, vector<16x8xf32> -> vector<16x8xf32>
    %cst_6 = arith.constant dense<0xFF800000> : vector<16xf32>
    %10 = vector.multi_reduction <maximumf>, %9, %cst_6 [1] : vector<16x8xf32> to vector<16xf32>
    %11 = vector.shape_cast %10 : vector<16xf32> to vector<16x1xf32>
    %12 = vector.broadcast %11 : vector<16x1xf32> to vector<16x8xf32>
    %13 = arith.subf %9, %12 : vector<16x8xf32>
    %14 = math.exp %13 : vector<16x8xf32>
    %cst_7 = arith.constant dense<0.000000e+00> : vector<16xf32>
    %15 = vector.multi_reduction <add>, %14, %cst_7 [1] : vector<16x8xf32> to vector<16xf32>
    %16 = vector.shape_cast %15 : vector<16xf32> to vector<16x1xf32>
    %17 = tpu.reciprocal %16 {approx = true} : vector<16x1xf32> -> vector<16x1xf32>
    %18 = vector.broadcast %17 : vector<16x1xf32> to vector<16x8xf32>
    %19 = arith.mulf %14, %18 : vector<16x8xf32>
    %cst_8 = arith.constant dense<0.000000e+00> : vector<16x16xf32>
    %20 = tpu.matmul %19, %8, %cst_8 {dimension_numbers = #tpu.dot_dimension_numbers<[1], [0], [0], [1], [0, 0, 1, 1], [], []>} : vector<16x8xf32>, vector<8x16xf32>, vector<16x16xf32> -> vector<16x16xf32>
    %21 = vector.extract_strided_slice %3 {offsets = [0, 16], sizes = [16, 16], strides = [1, 1]} : vector<16x64xf32> to vector<16x16xf32>
    %22 = vector.extract_strided_slice %5 {offsets = [0, 32], sizes = [8, 16], strides = [1, 1]} : vector<8x128xf32> to vector<8x16xf32>
    %23 = vector.extract_strided_slice %5 {offsets = [0, 48], sizes = [8, 16], strides = [1, 1]} : vector<8x128xf32> to vector<8x16xf32>
    %cst_9 = arith.constant dense<0.000000e+00> : vector<16x8xf32>
    %24 = tpu.matmul %21, %22, %cst_9 {dimension_numbers = #tpu.dot_dimension_numbers<[1], [1], [0], [0], [0, 0, 1, 0], [], []>} : vector<16x16xf32>, vector<8x16xf32>, vector<16x8xf32> -> vector<16x8xf32>
    %cst_10 = arith.constant dense<0xFF800000> : vector<16xf32>
    %25 = vector.multi_reduction <maximumf>, %24, %cst_10 [1] : vector<16x8xf32> to vector<16xf32>
    %26 = vector.shape_cast %25 : vector<16xf32> to vector<16x1xf32>
    %27 = vector.broadcast %26 : vector<16x1xf32> to vector<16x8xf32>
    %28 = arith.subf %24, %27 : vector<16x8xf32>
    %29 = math.exp %28 : vector<16x8xf32>
    %cst_11 = arith.constant dense<0.000000e+00> : vector<16xf32>
    %30 = vector.multi_reduction <add>, %29, %cst_11 [1] : vector<16x8xf32> to vector<16xf32>
    %31 = vector.shape_cast %30 : vector<16xf32> to vector<16x1xf32>
    %32 = tpu.reciprocal %31 {approx = true} : vector<16x1xf32> -> vector<16x1xf32>
    %33 = vector.broadcast %32 : vector<16x1xf32> to vector<16x8xf32>
    %34 = arith.mulf %29, %33 : vector<16x8xf32>
    %cst_12 = arith.constant dense<0.000000e+00> : vector<16x16xf32>
    %35 = tpu.matmul %34, %23, %cst_12 {dimension_numbers = #tpu.dot_dimension_numbers<[1], [0], [0], [1], [0, 0, 1, 1], [], []>} : vector<16x8xf32>, vector<8x16xf32>, vector<16x16xf32> -> vector<16x16xf32>
    %36 = vector.extract_strided_slice %3 {offsets = [0, 32], sizes = [16, 16], strides = [1, 1]} : vector<16x64xf32> to vector<16x16xf32>
    %37 = vector.extract_strided_slice %5 {offsets = [0, 64], sizes = [8, 16], strides = [1, 1]} : vector<8x128xf32> to vector<8x16xf32>
    %38 = vector.extract_strided_slice %5 {offsets = [0, 80], sizes = [8, 16], strides = [1, 1]} : vector<8x128xf32> to vector<8x16xf32>
    %cst_13 = arith.constant dense<0.000000e+00> : vector<16x8xf32>
    %39 = tpu.matmul %36, %37, %cst_13 {dimension_numbers = #tpu.dot_dimension_numbers<[1], [1], [0], [0], [0, 0, 1, 0], [], []>} : vector<16x16xf32>, vector<8x16xf32>, vector<16x8xf32> -> vector<16x8xf32>
    %cst_14 = arith.constant dense<0xFF800000> : vector<16xf32>
    %40 = vector.multi_reduction <maximumf>, %39, %cst_14 [1] : vector<16x8xf32> to vector<16xf32>
    %41 = vector.shape_cast %40 : vector<16xf32> to vector<16x1xf32>
    %42 = vector.broadcast %41 : vector<16x1xf32> to vector<16x8xf32>
    %43 = arith.subf %39, %42 : vector<16x8xf32>
    %44 = math.exp %43 : vector<16x8xf32>
    %cst_15 = arith.constant dense<0.000000e+00> : vector<16xf32>
    %45 = vector.multi_reduction <add>, %44, %cst_15 [1] : vector<16x8xf32> to vector<16xf32>
    %46 = vector.shape_cast %45 : vector<16xf32> to vector<16x1xf32>
    %47 = tpu.reciprocal %46 {approx = true} : vector<16x1xf32> -> vector<16x1xf32>
    %48 = vector.broadcast %47 : vector<16x1xf32> to vector<16x8xf32>
    %49 = arith.mulf %44, %48 : vector<16x8xf32>
    %cst_16 = arith.constant dense<0.000000e+00> : vector<16x16xf32>
    %50 = tpu.matmul %49, %38, %cst_16 {dimension_numbers = #tpu.dot_dimension_numbers<[1], [0], [0], [1], [0, 0, 1, 1], [], []>} : vector<16x8xf32>, vector<8x16xf32>, vector<16x16xf32> -> vector<16x16xf32>
    %51 = vector.extract_strided_slice %3 {offsets = [0, 48], sizes = [16, 16], strides = [1, 1]} : vector<16x64xf32> to vector<16x16xf32>
    %52 = vector.extract_strided_slice %5 {offsets = [0, 96], sizes = [8, 16], strides = [1, 1]} : vector<8x128xf32> to vector<8x16xf32>
    %53 = vector.extract_strided_slice %5 {offsets = [0, 112], sizes = [8, 16], strides = [1, 1]} : vector<8x128xf32> to vector<8x16xf32>
    %cst_17 = arith.constant dense<0.000000e+00> : vector<16x8xf32>
    %54 = tpu.matmul %51, %52, %cst_17 {dimension_numbers = #tpu.dot_dimension_numbers<[1], [1], [0], [0], [0, 0, 1, 0], [], []>} : vector<16x16xf32>, vector<8x16xf32>, vector<16x8xf32> -> vector<16x8xf32>
    %cst_18 = arith.constant dense<0xFF800000> : vector<16xf32>
    %55 = vector.multi_reduction <maximumf>, %54, %cst_18 [1] : vector<16x8xf32> to vector<16xf32>
    %56 = vector.shape_cast %55 : vector<16xf32> to vector<16x1xf32>
    %57 = vector.broadcast %56 : vector<16x1xf32> to vector<16x8xf32>
    %58 = arith.subf %54, %57 : vector<16x8xf32>
    %59 = math.exp %58 : vector<16x8xf32>
    %cst_19 = arith.constant dense<0.000000e+00> : vector<16xf32>
    %60 = vector.multi_reduction <add>, %59, %cst_19 [1] : vector<16x8xf32> to vector<16xf32>
    %61 = vector.shape_cast %60 : vector<16xf32> to vector<16x1xf32>
    %62 = tpu.reciprocal %61 {approx = true} : vector<16x1xf32> -> vector<16x1xf32>
    %63 = vector.broadcast %62 : vector<16x1xf32> to vector<16x8xf32>
    %64 = arith.mulf %59, %63 : vector<16x8xf32>
    %cst_20 = arith.constant dense<0.000000e+00> : vector<16x16xf32>
    %65 = tpu.matmul %64, %53, %cst_20 {dimension_numbers = #tpu.dot_dimension_numbers<[1], [0], [0], [1], [0, 0, 1, 1], [], []>} : vector<16x8xf32>, vector<8x16xf32>, vector<16x16xf32> -> vector<16x16xf32>
    %66 = tpu.concatenate %20, %35, %50, %65 in 1 : vector<16x16xf32>, vector<16x16xf32>, vector<16x16xf32>, vector<16x16xf32> -> vector<16x64xf32>
    %c0_21 = arith.constant 0 : index
    %c0_22 = arith.constant 0 : index
    %c0_23 = arith.constant 0 : index
    %67 = vector.load %arg4[%c0_21, %c0_22, %c0_23] : memref<1x16x64xf32, #tpu.memory_space<vmem>>, vector<1x16x64xf32>
    %68 = vector.shape_cast %67 : vector<1x16x64xf32> to vector<16x64xf32>
    %69 = vector.shape_cast %66 : vector<16x64xf32> to vector<1x16x64xf32>
    tpu.vector_store %arg4[%c0_21, %c0_22, %c0_23], %69 {strides = array<i32>} : memref<1x16x64xf32, #tpu.memory_space<vmem>>, vector<1x16x64xf32>,
    return
  }
  func.func @transform_0(%arg0: i32, %arg1: i32) -> (i32, i32, i32) {
    %c0_i32 = arith.constant 0 : i32
    %c0_i32_0 = arith.constant 0 : i32
    return %arg0, %c0_i32, %arg1 : i32, i32, i32
  }
  func.func @transform_1(%arg0: i32, %arg1: i32) -> (i32, i32, i32) {
    %c0_i32 = arith.constant 0 : i32
    %c0_i32_0 = arith.constant 0 : i32
    return %arg0, %c0_i32, %arg1 : i32, i32, i32
  }
  func.func @transform_2(%arg0: i32, %arg1: i32) -> (i32, i32, i32) {
    %c0_i32 = arith.constant 0 : i32
    %c0_i32_0 = arith.constant 0 : i32
    return %arg0, %c0_i32, %arg1 : i32, i32, i32
  }
}

module attributes {stable_mosaic.version = 11 : i64} {
  func.func @_matmul_bias_kernel(%arg0: i32, %arg1: i32, %arg2: i32, %arg3: memref<32x64xf32, #tpu.memory_space<vmem>>, %arg4: memref<64x32xf32, #tpu.memory_space<vmem>>, %arg5: memref<1x32xf32, #tpu.memory_space<vmem>>, %arg6: memref<32x32xf32, #tpu.memory_space<vmem>>, %arg7: memref<32x32xf32, #tpu.memory_space<vmem>>) attributes {dimension_semantics = [#tpu.dimension_semantics<parallel>, #tpu.dimension_semantics<parallel>, #tpu.dimension_semantics<arbitrary>], iteration_bounds = array<i64: 1, 1, 1>, scalar_prefetch = 0 : i64, scratch_operands = 1 : i64, tpu.core_type = #tpu.core_type<tc>, window_params = [{transform_indices = @transform_0, window_bounds = array<i64: 32, 64>}, {transform_indices = @transform_1, window_bounds = array<i64: 64, 32>}, {transform_indices = @transform_2, window_bounds = array<i64: 1, 32>}, {transform_indices = @transform_3, window_bounds = array<i64: 32, 32>}]} {
    %c0_i32 = arith.constant 0 : i32
    %0 = arith.cmpi eq, %arg2, %c0_i32 : i32
    %1 = arith.extui %0 : i1 to i32
    %c0_i32_0 = arith.constant 0 : i32
    %2 = arith.cmpi ne, %1, %c0_i32_0 : i32
    scf.if %2 {
      %cst_10 = arith.constant 0.000000e+00 : f32
      %12 = vector.broadcast %cst_10 : f32 to vector<32x32xf32>
      %c0_11 = arith.constant 0 : index
      %c0_12 = arith.constant 0 : index
      %13 = vector.load %arg7[%c0_11, %c0_12] : memref<32x32xf32, #tpu.memory_space<vmem>>, vector<32x32xf32>
      tpu.vector_store %arg7[%c0_11, %c0_12], %12 {strides = array<i32>} : memref<32x32xf32, #tpu.memory_space<vmem>>, vector<32x32xf32>,
    } else {
    }
    %c0 = arith.constant 0 : index
    %c0_1 = arith.constant 0 : index
    %3 = vector.load %arg7[%c0, %c0_1] : memref<32x32xf32, #tpu.memory_space<vmem>>, vector<32x32xf32>
    %c0_2 = arith.constant 0 : index
    %c0_3 = arith.constant 0 : index
    %4 = vector.load %arg3[%c0_2, %c0_3] : memref<32x64xf32, #tpu.memory_space<vmem>>, vector<32x64xf32>
    %c0_4 = arith.constant 0 : index
    %c0_5 = arith.constant 0 : index
    %5 = vector.load %arg4[%c0_4, %c0_5] : memref<64x32xf32, #tpu.memory_space<vmem>>, vector<64x32xf32>
    %cst = arith.constant dense<0.000000e+00> : vector<32x32xf32>
    %6 = tpu.matmul %4, %5, %cst {dimension_numbers = #tpu.dot_dimension_numbers<[1], [0], [0], [1], [0, 0, 1, 1], [], []>} : vector<32x64xf32>, vector<64x32xf32>, vector<32x32xf32> -> vector<32x32xf32>
    %7 = arith.addf %3, %6 : vector<32x32xf32>
    %c0_6 = arith.constant 0 : index
    %c0_7 = arith.constant 0 : index
    %8 = vector.load %arg7[%c0_6, %c0_7] : memref<32x32xf32, #tpu.memory_space<vmem>>, vector<32x32xf32>
    tpu.vector_store %arg7[%c0_6, %c0_7], %7 {strides = array<i32>} : memref<32x32xf32, #tpu.memory_space<vmem>>, vector<32x32xf32>,
    %c0_i32_8 = arith.constant 0 : i32
    %9 = arith.cmpi eq, %arg2, %c0_i32_8 : i32
    %10 = arith.extui %9 : i1 to i32
    %c0_i32_9 = arith.constant 0 : i32
    %11 = arith.cmpi ne, %10, %c0_i32_9 : i32
    scf.if %11 {
      %c0_10 = arith.constant 0 : index
      %c0_11 = arith.constant 0 : index
      %12 = vector.load %arg7[%c0_10, %c0_11] : memref<32x32xf32, #tpu.memory_space<vmem>>, vector<32x32xf32>
      %c0_12 = arith.constant 0 : index
      %c0_13 = arith.constant 0 : index
      %13 = vector.load %arg5[%c0_12, %c0_13] : memref<1x32xf32, #tpu.memory_space<vmem>>, vector<1x32xf32>
      %14 = vector.broadcast %13 : vector<1x32xf32> to vector<32x32xf32>
      %15 = arith.addf %12, %14 : vector<32x32xf32>
      %c0_14 = arith.constant 0 : index
      %c0_15 = arith.constant 0 : index
      %16 = vector.load %arg6[%c0_14, %c0_15] : memref<32x32xf32, #tpu.memory_space<vmem>>, vector<32x32xf32>
      tpu.vector_store %arg6[%c0_14, %c0_15], %15 {strides = array<i32>} : memref<32x32xf32, #tpu.memory_space<vmem>>, vector<32x32xf32>,
    } else {
    }
    return
  }
  func.func @transform_0(%arg0: i32, %arg1: i32, %arg2: i32) -> (i32, i32) {
    %c0_i32 = arith.constant 0 : i32
    return %arg0, %arg2 : i32, i32
  }
  func.func @transform_1(%arg0: i32, %arg1: i32, %arg2: i32) -> (i32, i32) {
    %c0_i32 = arith.constant 0 : i32
    return %arg2, %arg1 : i32, i32
  }
  func.func @transform_2(%arg0: i32, %arg1: i32, %arg2: i32) -> (i32, i32) {
    %c0_i32 = arith.constant 0 : i32
    %c0_i32_0 = arith.constant 0 : i32
    return %c0_i32, %arg1 : i32, i32
  }
  func.func @transform_3(%arg0: i32, %arg1: i32, %arg2: i32) -> (i32, i32) {
    %c0_i32 = arith.constant 0 : i32
    return %arg0, %arg1 : i32, i32
  }
}

</mosaic_0001>

<llo_original>
// kernel: cross_attention_forward.4
$region0: #{cross_attention_forward.4}
  #allocation0 [shape = 'u32[]', space=smem, size = 0x4, offset = 0x4, fixed_abs, tag = 'smem constant byte address 0x4 - core index']
  #allocation1 [shape = 'u32[144,128]{1,0:T(1,128)}', space=vmem, size = 0x12000, scoped, tag = 'internal scratch']
  #allocation2 [shape = 'f32[32,64]{1,0:T(8,128)}', space=vmem, size = 0x4000, scoped, tag = 'scratch operand']
  %s0 = inlined_call_operand.vmem [shape: f32[32,32], index: 0, kind: input, shape index: {}]
  %s1 = inlined_call_operand.vmem [shape: f32[32,64], index: 1, kind: input, shape index: {}]
  %s2 = inlined_call_operand.vmem [shape: f32[32,64], index: 2, kind: output, shape index: {}]
  %s3 = sld [smem:[#allocation0]]
  $region26: #{cross_attention_forward.4} parent=0
    _
  %s5 = ssub.s32 1, %s3
  %s6 = scalar_select 0, %s5, %s3
  // Predicated region
  $region2: #{cross_attention_forward.4} parent=0 // pred_check
    _
  $region3: #{cross_attention_forward.4} parent=0 // pred_check_branch
    %8 = sbr.rel (0) target = $region5
  $region4: #{cross_attention_forward.4} parent=0 // pred_region
    _
  $region5: #{cross_attention_forward.4} parent=0 // pred_fallthru
    _
  // Predicated region
  $region6: #{cross_attention_forward.4} parent=0 // pred_check
    _
  $region7: #{cross_attention_forward.4} parent=0 // pred_check_branch
    %10 = sbr.rel (0) target = $region9
  $region8: #{cross_attention_forward.4} parent=0 // pred_region
    _
  $region9: #{cross_attention_forward.4} parent=0 // pred_fallthru
    _
  %p11 = scmp.eq.s32.totalorder 0, 0
  // Predicated region
  $region10: #{cross_attention_forward.4} parent=0 // pred_check
    %p12 = pneg %p11
  $region11: #{cross_attention_forward.4} parent=0 // pred_check_branch
    %14 = sbr.rel (%p12) target = $region13
  $region12: #{cross_attention_forward.4} parent=0 // pred_region
    %vm15 = vcmask 523264
    %16 = vst.msk [vmem:[#allocation2] sm:$0xff] %vm15, 0.0
    %17 = vst.msk [vmem:[#allocation2 + $0x8] sm:$0xff] %vm15, 0.0
    %18 = vst.msk [vmem:[#allocation2 + $0x10] sm:$0xff] %vm15, 0.0
    %19 = vst.msk [vmem:[#allocation2 + $0x18] sm:$0xff] %vm15, 0.0
  $region13: #{cross_attention_forward.4} parent=0 // pred_fallthru
    _
  %v20 = vld [vmem:[#allocation2] sm:$0xff]
  %v21 = vld [vmem:[#allocation2 + $0x8] sm:$0xff]
  %v22 = vld [vmem:[#allocation2 + $0x10] sm:$0xff]
  %v23 = vld [vmem:[#allocation2 + $0x18] sm:$0xff]
  %v24 = vld [vmem:[%s0] sm:$0xff]
  %v25 = vld [vmem:[%s0 + $0x8] sm:$0xff]
  %v26 = vld [vmem:[%s0 + $0x10] sm:$0xff]
  %v27 = vld [vmem:[%s0 + $0x18] sm:$0xff]
  %v28 = vld [vmem:[%s1] sm:$0xff]
  %v29 = vld [vmem:[%s1 + $0x8] sm:$0xff]
  %v30 = vld [vmem:[%s1 + $0x10] sm:$0xff]
  %v31 = vld [vmem:[%s1 + $0x18] sm:$0xff]
  %vm32 = vcmask 261120
  %v34 = vsel %vm32, %v24, 0
  %v37 = vsel %vm32, %v25, 0
  %v40 = vsel %vm32, %v26, 0
  %v43 = vsel %vm32, %v27, 0
  %45 = vmatprep.subr.mxu0 0.0
  %46 = vmatpush1.msra.mxu0 %v28
  %47 = vmatprep.subr.mxu0 0.0
  %48 = vmatpush1.msra.mxu0 %v29
  %49 = vmatprep.subr.mxu0 0.0
  %50 = vmatpush1.msra.mxu0 %v30
  %51 = vmatprep.subr.mxu0 0.0
  %52 = vmatpush1.msra.mxu0 %v31
  %53 = vmatprep.subr.mxu0 0.0
  %54 = vmatpush1.msra.mxu0 0.0
  %55 = vmatprep.subr.mxu0 0.0
  %56 = vmatpush1.msra.mxu0 0.0
  %57 = vmatprep.subr.mxu0 0.0
  %58 = vmatpush1.msra.mxu0 0.0
  %59 = vmatprep.subr.mxu0 0.0
  %60 = vmatpush1.msra.mxu0 0.0
  %61 = vmatprep.subr.mxu0 0.0
  %62 = vmatpush1.msra.mxu0 0.0
  %63 = vmatprep.subr.mxu0 0.0
  %64 = vmatpush1.msra.mxu0 0.0
  %65 = vmatprep.subr.mxu0 0.0
  %66 = vmatpush1.msra.mxu0 0.0
  %67 = vmatprep.subr.mxu0 0.0
  %68 = vmatpush1.msra.mxu0 0.0
  %69 = vmatprep.subr.mxu0 0.0
  %70 = vmatpush1.msra.mxu0 0.0
  %71 = vmatprep.subr.mxu0 0.0
  %72 = vmatpush1.msra.mxu0 0.0
  %73 = vmatprep.subr.mxu0 0.0
  %74 = vmatpush1.msra.mxu0 0.0
  %75 = vmatprep.subr.mxu0 0.0
  %76 = vmatpush1.msra.mxu0 0.0
  %77 = vmatprep.subr.mxu0 0.0
  %78 = vmatpush1.msra.mxu0 0.0
  %79 = vmatprep.subr.mxu0 0.0
  %80 = vmatpush1.msra.mxu0 0.0
  %81 = vmatprep.subr.mxu0 0.0
  %82 = vmatpush1.msra.mxu0 0.0
  %83 = vmatprep.subr.mxu0 0.0
  %84 = vmatpush1.msra.mxu0 0.0
  %85 = vmatprep.subr.mxu0 0.0
  %86 = vmatpush1.msra.mxu0 0.0
  %87 = vmatprep.subr.mxu0 0.0
  %88 = vmatpush1.msra.mxu0 0.0
  %89 = vmatprep.subr.mxu0 0.0
  %90 = vmatpush1.msra.mxu0 0.0
  %91 = vmatprep.subr.mxu0 0.0
  %92 = vmatpush1.msra.mxu0 0.0
  %93 = vmatprep.subr.mxu0 0.0
  %94 = vmatpush1.msra.mxu0 0.0
  %95 = vmatprep.subr.mxu0 0.0
  %96 = vmatpush1.msra.mxu0 0.0
  %97 = vmatprep.subr.mxu0 0.0
  %98 = vmatpush1.msra.mxu0 0.0
  %99 = vmatprep.subr.mxu0 0.0
  %100 = vmatpush1.msra.mxu0 0.0
  %101 = vmatprep.subr.mxu0 0.0
  %102 = vmatpush1.msra.mxu0 0.0
  %103 = vmatprep.subr.mxu0 0.0
  %104 = vmatpush1.msra.mxu0 0.0
  %105 = vmatprep.subr.mxu0 0.0
  %106 = vmatpush1.msra.mxu0 0.0
  %107 = vmatprep.subr.mxu0 0.0
  %108 = vmatpush1.msra.mxu0 0.0
  %109 = vmatprep.mubr.f32.mxu0 0.0
  %110 = vmatmul.mubr.f32.gmra.mrb[0].mxu0 %v34
  %v111 = vpop.f32.mrb[0].mxu0
  %v112 = vadd.f32 0.0, %v111
  %v113 = vpop.f32.mrb[0].mxu0
  %114 = vmatprep.mubr.f32.mxu0 0.0
  %115 = vmatmul.mubr.f32.gmra.mrb[0].mxu0 %v37
  %v116 = vpop.f32.mrb[0].mxu0
  %v117 = vadd.f32 0.0, %v116
  %v118 = vpop.f32.mrb[0].mxu0
  %119 = vmatprep.mubr.f32.mxu0 0.0
  %120 = vmatmul.mubr.f32.gmra.mrb[0].mxu0 %v40
  %v121 = vpop.f32.mrb[0].mxu0
  %v122 = vadd.f32 0.0, %v121
  %v123 = vpop.f32.mrb[0].mxu0
  %124 = vmatprep.mubr.f32.mxu0 0.0
  %125 = vmatmul.mubr.f32.gmra.mrb[0].mxu0 %v43
  %v126 = vpop.f32.mrb[0].mxu0
  %v127 = vadd.f32 0.0, %v126
  %v128 = vpop.f32.mrb[0].mxu0
  %129 = vdwg.mxu0
  %v130 = vadd.f32 %v20, %v112
  %v131 = vadd.f32 %v21, %v117
  %v132 = vadd.f32 %v22, %v122
  %v133 = vadd.f32 %v23, %v127
  %vm134 = vcmask 523264
  %135 = vst.msk [vmem:[#allocation2] sm:$0xff] %vm134, %v130
  %136 = vst.msk [vmem:[#allocation2 + $0x8] sm:$0xff] %vm134, %v131
  %137 = vst.msk [vmem:[#allocation2 + $0x10] sm:$0xff] %vm134, %v132
  %138 = vst.msk [vmem:[#allocation2 + $0x18] sm:$0xff] %vm134, %v133
  // Predicated region
  $region14: #{cross_attention_forward.4} parent=0 // pred_check
    %p139 = pneg %p11
  $region15: #{cross_attention_forward.4} parent=0 // pred_check_branch
    %141 = sbr.rel (%p139) target = $region17
  $region16: #{cross_attention_forward.4} parent=0 // pred_region
    %v142 = vld [vmem:[#allocation2] sm:$0xff]
    %v143 = vld [vmem:[#allocation2 + $0x8] sm:$0xff]
    %v144 = vld [vmem:[#allocation2 + $0x10] sm:$0xff]
    %v145 = vld [vmem:[#allocation2 + $0x18] sm:$0xff]
    %146 = vst.msk [vmem:[%s2] sm:$0xff] %vm134, %v142
    %147 = vst.msk [vmem:[%s2 + $0x8] sm:$0xff] %vm134, %v143
    %148 = vst.msk [vmem:[%s2 + $0x10] sm:$0xff] %vm134, %v144
    %149 = vst.msk [vmem:[%s2 + $0x18] sm:$0xff] %vm134, %v145
  $region17: #{cross_attention_forward.4} parent=0 // pred_fallthru
    _
  // Predicated region
  $region18: #{cross_attention_forward.4} parent=0 // pred_check
    _
  $region19: #{cross_attention_forward.4} parent=0 // pred_check_branch
    %151 = sbr.rel (0) target = $region21
  $region20: #{cross_attention_forward.4} parent=0 // pred_region
    _
  $region21: #{cross_attention_forward.4} parent=0 // pred_fallthru
    _
  // Predicated region
  $region22: #{cross_attention_forward.4} parent=0 // pred_check
    _
  $region23: #{cross_attention_forward.4} parent=0 // pred_check_branch
    %153 = sbr.rel (0) target = $region25
  $region24: #{cross_attention_forward.4} parent=0 // pred_region
    _
  $region25: #{cross_attention_forward.4} parent=0 // pred_fallthru
    _

// kernel: cross_attention_forward.5
$region0: #{cross_attention_forward.5}
  #allocation0 [shape = 'u32[]', space=smem, size = 0x4, offset = 0x4, fixed_abs, tag = 'smem constant byte address 0x4 - core index']
  #allocation1 [shape = 'u32[144,128]{1,0:T(1,128)}', space=vmem, size = 0x12000, scoped, tag = 'internal scratch']
  #allocation2 [shape = 'f32[16,128]{1,0:T(8,128)}', space=vmem, size = 0x2000, scoped, tag = 'scratch operand']
  %s0 = inlined_call_operand.vmem [shape: f32[16,24], index: 0, kind: input, shape index: {}]
  %s1 = inlined_call_operand.hbm [shape: f32[24,128], index: 1, kind: input, shape index: {}]
  %s2 = inlined_call_operand.vmem [shape: f32[16,128], index: 2, kind: output, shape index: {}]
  %s3 = sld [smem:[#allocation0]]
  $region30: #{cross_attention_forward.5} parent=0
    _
  %s5 = ssub.s32 1, %s3
  %s6 = scalar_select 0, %s5, %s3
  $region1: #{cross_attention_forward.5} parent=0
    #allocation3 [shape = 'u8[12288]{0}', space=vmem, size = 0x3000, scoped, tag = 'input window, operand 1, single buffered']
    #allocation4 [shape = 's32[1]{0}', space=sflag, size = 0x4, scoped, tag = 'scoped memory for cross_attention_forward.5']
    %7 = vsyncpa [#allocation4], 0
    // Predicated region
    $region2: #{cross_attention_forward.5} parent=1 // pred_check
      _
    $region3: #{cross_attention_forward.5} parent=1 // pred_check_branch
      %9 = sbr.rel (0) target = $region5
    $region4: #{cross_attention_forward.5} parent=1 // pred_region
      _
    $region5: #{cross_attention_forward.5} parent=1 // pred_fallthru
      _
    // Predicated region
    $region6: #{cross_attention_forward.5} parent=1 // pred_check
      _
    $region7: #{cross_attention_forward.5} parent=1 // pred_check_branch
      %11 = sbr.rel (0) target = $region9
    $region8: #{cross_attention_forward.5} parent=1 // pred_region
      %s13 = ssub.s32 384, 384
      %14 = vsyncadd [#allocation4], %s13
      %s15 = sshll.u32 [#allocation3], 4
      %s16 = int_to_ptr.vmem [resolvable:$true] %s15
      %21 = dma.hbm_to_vmem [thread:$0]  %s1, 384, %s16, [#allocation4], 128, 128, 8
    $region9: #{cross_attention_forward.5} parent=1 // pred_fallthru
      _
    // Predicated region
    $region10: #{cross_attention_forward.5} parent=1 // pred_check
      _
    $region11: #{cross_attention_forward.5} parent=1 // pred_check_branch
      %23 = sbr.rel (0) target = $region13
    $region12: #{cross_attention_forward.5} parent=1 // pred_region
      %24 = dma.done [#allocation4], 384
    $region13: #{cross_attention_forward.5} parent=1 // pred_fallthru
      _
    %p25 = scmp.eq.s32.totalorder 0, 0
    // Predicated region
    $region14: #{cross_attention_forward.5} parent=1 // pred_check
      %p26 = pneg %p25
    $region15: #{cross_attention_forward.5} parent=1 // pred_check_branch
      %28 = sbr.rel (%p26) target = $region17
    $region16: #{cross_attention_forward.5} parent=1 // pred_region
      %29 = vst [vmem:[#allocation2] sm:$0xff] 0.0
      %30 = vst [vmem:[#allocation2 + $0x8] sm:$0xff] 0.0
    $region17: #{cross_attention_forward.5} parent=1 // pred_fallthru
      _
    %v31 = vld [vmem:[#allocation2] sm:$0xff]
    %v32 = vld [vmem:[#allocation2 + $0x8] sm:$0xff]
    %v33 = vld [vmem:[%s0] sm:$0xff]
    %v34 = vld [vmem:[%s0 + $0x8] sm:$0xff]
    %v35 = vld [vmem:[#allocation3] sm:$0xff]
    %v36 = vld [vmem:[#allocation3 + $0x8] sm:$0xff]
    %v37 = vld [vmem:[#allocation3 + $0x10] sm:$0xff]
    %vm38 = vcmask 195584
    %v40 = vsel %vm38, %v33, 0
    %v43 = vsel %vm38, %v34, 0
    %45 = vmatprep.subr.mxu0 0.0
    %46 = vmatpush1.msra.mxu0 %v35
    %47 = vmatprep.subr.mxu0 0.0
    %48 = vmatpush1.msra.mxu0 %v36
    %49 = vmatprep.subr.mxu0 0.0
    %50 = vmatpush1.msra.mxu0 %v37
    %51 = vmatprep.subr.mxu0 0.0
    %52 = vmatpush1.msra.mxu0 0.0
    %53 = vmatprep.subr.mxu0 0.0
    %54 = vmatpush1.msra.mxu0 0.0
    %55 = vmatprep.subr.mxu0 0.0
    %56 = vmatpush1.msra.mxu0 0.0
    %57 = vmatprep.subr.mxu0 0.0
    %58 = vmatpush1.msra.mxu0 0.0
    %59 = vmatprep.subr.mxu0 0.0
    %60 = vmatpush1.msra.mxu0 0.0
    %61 = vmatprep.subr.mxu0 0.0
    %62 = vmatpush1.msra.mxu0 0.0
    %63 = vmatprep.subr.mxu0 0.0
    %64 = vmatpush1.msra.mxu0 0.0
    %65 = vmatprep.subr.mxu0 0.0
    %66 = vmatpush1.msra.mxu0 0.0
    %67 = vmatprep.subr.mxu0 0.0
    %68 = vmatpush1.msra.mxu0 0.0
    %69 = vmatprep.subr.mxu0 0.0
    %70 = vmatpush1.msra.mxu0 0.0
    %71 = vmatprep.subr.mxu0 0.0
    %72 = vmatpush1.msra.mxu0 0.0
    %73 = vmatprep.subr.mxu0 0.0
    %74 = vmatpush1.msra.mxu0 0.0
    %75 = vmatprep.subr.mxu0 0.0
    %76 = vmatpush1.msra.mxu0 0.0
    %77 = vmatprep.subr.mxu0 0.0
    %78 = vmatpush1.msra.mxu0 0.0
    %79 = vmatprep.subr.mxu0 0.0
    %80 = vmatpush1.msra.mxu0 0.0
    %81 = vmatprep.subr.mxu0 0.0
    %82 = vmatpush1.msra.mxu0 0.0
    %83 = vmatprep.subr.mxu0 0.0
    %84 = vmatpush1.msra.mxu0 0.0
    %85 = vmatprep.subr.mxu0 0.0
    %86 = vmatpush1.msra.mxu0 0.0
    %87 = vmatprep.subr.mxu0 0.0
    %88 = vmatpush1.msra.mxu0 0.0
    %89 = vmatprep.subr.mxu0 0.0
    %90 = vmatpush1.msra.mxu0 0.0
    %91 = vmatprep.subr.mxu0 0.0
    %92 = vmatpush1.msra.mxu0 0.0
    %93 = vmatprep.subr.mxu0 0.0
    %94 = vmatpush1.msra.mxu0 0.0
    %95 = vmatprep.subr.mxu0 0.0
    %96 = vmatpush1.msra.mxu0 0.0
    %97 = vmatprep.subr.mxu0 0.0
    %98 = vmatpush1.msra.mxu0 0.0
    %99 = vmatprep.subr.mxu0 0.0
    %100 = vmatpush1.msra.mxu0 0.0
    %101 = vmatprep.subr.mxu0 0.0
    %102 = vmatpush1.msra.mxu0 0.0
    %103 = vmatprep.subr.mxu0 0.0
    %104 = vmatpush1.msra.mxu0 0.0
    %105 = vmatprep.subr.mxu0 0.0
    %106 = vmatpush1.msra.mxu0 0.0
    %107 = vmatprep.subr.mxu0 0.0
    %108 = vmatpush1.msra.mxu0 0.0
    %109 = vmatprep.mubr.f32.mxu0 0.0
    %110 = vmatmul.mubr.f32.gmra.mrb[0].mxu0 %v40
    %v111 = vpop.f32.mrb[0].mxu0
    %v112 = vadd.f32 0.0, %v111
    %v113 = vpop.f32.mrb[0].mxu0
    %114 = vmatprep.mubr.f32.mxu0 0.0
    %115 = vmatmul.mubr.f32.gmra.mrb[0].mxu0 %v43
    %v116 = vpop.f32.mrb[0].mxu0
    %v117 = vadd.f32 0.0, %v116
    %v118 = vpop.f32.mrb[0].mxu0
    %119 = vdwg.mxu0
    %v120 = vadd.f32 %v31, %v112
    %v121 = vadd.f32 %v32, %v117
    %122 = vst [vmem:[#allocation2] sm:$0xff] %v120
    %123 = vst [vmem:[#allocation2 + $0x8] sm:$0xff] %v121
    // Predicated region
    $region18: #{cross_attention_forward.5} parent=1 // pred_check
      %p124 = pneg %p25
    $region19: #{cross_attention_forward.5} parent=1 // pred_check_branch
      %126 = sbr.rel (%p124) target = $region21
    $region20: #{cross_attention_forward.5} parent=1 // pred_region
      %v127 = vld [vmem:[#allocation2] sm:$0xff]
      %v128 = vld [vmem:[#allocation2 + $0x8] sm:$0xff]
      %129 = vst [vmem:[%s2] sm:$0xff] %v127
      %130 = vst [vmem:[%s2 + $0x8] sm:$0xff] %v128
    $region21: #{cross_attention_forward.5} parent=1 // pred_fallthru
      _
    // Predicated region
    $region22: #{cross_attention_forward.5} parent=1 // pred_check
      _
    $region23: #{cross_attention_forward.5} parent=1 // pred_check_branch
      %132 = sbr.rel (0) target = $region25
    $region24: #{cross_attention_forward.5} parent=1 // pred_region
      _
    $region25: #{cross_attention_forward.5} parent=1 // pred_fallthru
      _
    // Predicated region
    $region26: #{cross_attention_forward.5} parent=1 // pred_check
      _
    $region27: #{cross_attention_forward.5} parent=1 // pred_check_branch
      %134 = sbr.rel (0) target = $region29
    $region28: #{cross_attention_forward.5} parent=1 // pred_region
      _
    $region29: #{cross_attention_forward.5} parent=1 // pred_fallthru
      _
    %135 = vsyncpa [#allocation4], 1

// kernel: cross_attention_forward.6
$region0: #{cross_attention_forward.6}
  #allocation0 [shape = 'u32[]', space=smem, size = 0x4, offset = 0x4, fixed_abs, tag = 'smem constant byte address 0x4 - core index']
  #allocation1 [shape = 'u32[144,128]{1,0:T(1,128)}', space=vmem, size = 0x12000, scoped, tag = 'internal scratch']
  %s0 = inlined_call_operand.vmem [shape: f32[2,16,64], index: 0, kind: input, shape index: {}]
  %s1 = inlined_call_operand.vmem [shape: f32[2,8,128], index: 1, kind: input, shape index: {}]
  %s2 = inlined_call_operand.vmem [shape: f32[2,16,64], index: 2, kind: output, shape index: {}]
  %s3 = sld [smem:[#allocation0]]
  $region41: #{cross_attention_forward.6} parent=0
    _
  %s5 = ssub.s32 1, %s3
  %s6 = scalar_select 0, %s5, %s3
  loop: start=0, step=1, limit=4
  $region2: #{cross_attention_forward.6} parent=0 // loop_pre_header
    _
  $region3: #{cross_attention_forward.6} parent=0 // loop_header
    %s8 = sphi 0, %s12
    %p9 = scmp.ge.s32.totalorder %s8, 4
    %s15 = sphi 0, %s27
    %s16 = sphi 0, %s23
    %s17 = sphi 0, %s15
    %s18 = sphi 0, %s16
    %s19 = sphi 0, %s17
    %s20 = sphi 0, %s18
    %s32 = sphi 0, %s34
    %s35 = sphi 0, %s32
    %s36 = sphi 0, %s35
    %s52 = sphi 0, %s36
    %s60 = sphi 0, %s62
    %s63 = sphi 0, %s60
    %s64 = sphi 0, %s63
    %s80 = sphi 0, %s64
    %s88 = sphi 0, %s90
    %s91 = sphi 0, %s88
    %s92 = sphi 0, %s91
    %s108 = sphi 0, %s92
  $region4: #{cross_attention_forward.6} parent=0 // loop_header_branch
    %11 = sbr.rel (%p9) target = $region8
  $region5: #{cross_attention_forward.6} parent=0 // loop_body
    %s13 = ssub.s32 %s8, 1
    %s14 = ssub.s32 %s8, 2
    %s21 = sadd.s32 1, %s16
    %p22 = scmp.ge.s32.totalorder %s21, 1
    %s23 = scalar_select %p22, 0, %s21
    %s24 = sadd.s32 1, %s15
    %s25 = scalar_select %p22, %s24, %s15
    %p26 = scmp.ge.s32.totalorder %s25, 2
    %s27 = scalar_select %p26, 0, %s25
    %s28 = ssub.s32 %s15, %s27
    %s29 = ssub.s32 %s16, %s23
    %s30 = sor.u32 %s28, %s29
    %p31 = scmp.eq.s32.totalorder %s30, 0
    %s33 = sadd.s32 %s32, 1
    %s34 = scalar_select %p31, %s32, %s33
    %p37 = pneg %p31
    %p38 = scmp.eq.s32.totalorder %s8, 1
    %p39 = por %p37, %p38
    %p40 = scmp.ne.s32.totalorder %s32, %s35
    %p41 = scmp.eq.s32.totalorder %s8, 0
    %p42 = por %p40, %p41
    %p43 = scmp.ne.s32.totalorder %s32, %s35
    %p44 = scmp.eq.s32.totalorder %s13, 1
    %p45 = por %p43, %p44
    %p46 = scmp.ne.s32.totalorder %s35, %s36
    %p47 = scmp.eq.s32.totalorder %s13, 0
    %p48 = por %p46, %p47
    %p49 = scmp.ne.s32.totalorder %s35, %s36
    %p50 = scmp.eq.s32.totalorder %s14, 1
    %p51 = por %p49, %p50
    %p53 = scmp.ne.s32.totalorder %s36, %s52
    %p54 = scmp.eq.s32.totalorder %s14, 0
    %p55 = por %p53, %p54
    %s56 = ssub.s32 %s15, %s27
    %s57 = ssub.s32 %s16, %s23
    %s58 = sor.u32 %s56, %s57
    %p59 = scmp.eq.s32.totalorder %s58, 0
    %s61 = sadd.s32 %s60, 1
    %s62 = scalar_select %p59, %s60, %s61
    %p65 = pneg %p59
    %p66 = scmp.eq.s32.totalorder %s8, 1
    %p67 = por %p65, %p66
    %p68 = scmp.ne.s32.totalorder %s60, %s63
    %p69 = scmp.eq.s32.totalorder %s8, 0
    %p70 = por %p68, %p69
    %p71 = scmp.ne.s32.totalorder %s60, %s63
    %p72 = scmp.eq.s32.totalorder %s13, 1
    %p73 = por %p71, %p72
    %p74 = scmp.ne.s32.totalorder %s63, %s64
    %p75 = scmp.eq.s32.totalorder %s13, 0
    %p76 = por %p74, %p75
    %p77 = scmp.ne.s32.totalorder %s63, %s64
    %p78 = scmp.eq.s32.totalorder %s14, 1
    %p79 = por %p77, %p78
    %p81 = scmp.ne.s32.totalorder %s64, %s80
    %p82 = scmp.eq.s32.totalorder %s14, 0
    %p83 = por %p81, %p82
    %s84 = ssub.s32 %s15, %s27
    %s85 = ssub.s32 %s16, %s23
    %s86 = sor.u32 %s84, %s85
    %p87 = scmp.eq.s32.totalorder %s86, 0
    %s89 = sadd.s32 %s88, 1
    %s90 = scalar_select %p87, %s88, %s89
    %p93 = pneg %p87
    %p94 = scmp.eq.s32.totalorder %s8, 1
    %p95 = por %p93, %p94
    %p96 = scmp.ne.s32.totalorder %s88, %s91
    %p97 = scmp.eq.s32.totalorder %s8, 0
    %p98 = por %p96, %p97
    %p99 = scmp.ne.s32.totalorder %s88, %s91
    %p100 = scmp.eq.s32.totalorder %s13, 1
    %p101 = por %p99, %p100
    %p102 = scmp.ne.s32.totalorder %s91, %s92
    %p103 = scmp.eq.s32.totalorder %s13, 0
    %p104 = por %p102, %p103
    %p105 = scmp.ne.s32.totalorder %s91, %s92
    %p106 = scmp.eq.s32.totalorder %s14, 1
    %p107 = por %p105, %p106
    %p109 = scmp.ne.s32.totalorder %s92, %s108
    %p110 = scmp.eq.s32.totalorder %s14, 0
    %p111 = por %p109, %p110
    %p112 = scmp.le.s32.totalorder 1, %s8
    %p113 = scmp.lt.s32.totalorder %s8, 3
    %p114 = pnand %p112, %p113
    %p115 = pneg %p114
    // Predicated region
    $region9: #{cross_attention_forward.6} parent=5 // pred_check
      _
    $region10: #{cross_attention_forward.6} parent=5 // pred_check_branch
      %117 = sbr.rel (%p114) target = $region12
    $region11: #{cross_attention_forward.6} parent=5 // pred_region
      %s118 = ssub.s32 %s8, 1
    $region12: #{cross_attention_forward.6} parent=5 // pred_fallthru
      _
    %p119 = scmp.lt.s32.totalorder %s8, 2
    // Predicated region
    $region13: #{cross_attention_forward.6} parent=5 // pred_check
      %p120 = pneg %p119
    $region14: #{cross_attention_forward.6} parent=5 // pred_check_branch
      %122 = sbr.rel (%p120) target = $region16
    $region15: #{cross_attention_forward.6} parent=5 // pred_region
      // Predicated region
      $region17: #{cross_attention_forward.6} parent=15 // pred_check
        %p123 = pneg %p42
      $region18: #{cross_attention_forward.6} parent=15 // pred_check_branch
        %125 = sbr.rel (%p123) target = $region20
      $region19: #{cross_attention_forward.6} parent=15 // pred_region
        %p126 = scmp.lt.s32.totalorder %s15, 1
        %s127 = scalar_select %p126, %s15, 1
        %p128 = scmp.lt.s32.totalorder %s16, 0
        %s129 = scalar_select %p128, %s16, 0
        %s130 = smul.addr %s127, 2
        %s131 = sadd.s32 %s129, %s130
        %s132 = smul.addr %s131, 8
        %s133 = scalar_lea.vmem %s0, %s132
      $region20: #{cross_attention_forward.6} parent=15 // pred_fallthru
        _
      // Predicated region
      $region21: #{cross_attention_forward.6} parent=15 // pred_check
        %p134 = pneg %p70
      $region22: #{cross_attention_forward.6} parent=15 // pred_check_branch
        %136 = sbr.rel (%p134) target = $region24
      $region23: #{cross_attention_forward.6} parent=15 // pred_region
        %p137 = scmp.lt.s32.totalorder %s15, 1
        %s138 = scalar_select %p137, %s15, 1
        %p139 = scmp.lt.s32.totalorder %s16, 0
        %s140 = scalar_select %p139, %s16, 0
        %s141 = sadd.s32 %s140, %s138
        %s142 = smul.addr %s141, 8
        %s143 = scalar_lea.vmem %s1, %s142
      $region24: #{cross_attention_forward.6} parent=15 // pred_fallthru
        _
    $region16: #{cross_attention_forward.6} parent=5 // pred_fallthru
      _
    %p144 = scmp.le.s32.totalorder 1, %s8
    %p145 = scmp.lt.s32.totalorder %s8, 3
    %p146 = pnand %p144, %p145
    %p147 = pneg %p146
    // Predicated region
    $region25: #{cross_attention_forward.6} parent=5 // pred_check
      _
    $region26: #{cross_attention_forward.6} parent=5 // pred_check_branch
      %149 = sbr.rel (%p146) target = $region28
    $region27: #{cross_attention_forward.6} parent=5 // pred_region
      %s150 = ssub.s32 %s8, 1
      %p151 = scmp.lt.s32.totalorder %s17, 1
      %s152 = scalar_select %p151, %s17, 1
      %p153 = scmp.lt.s32.totalorder %s18, 0
      %s154 = scalar_select %p153, %s18, 0
      %s155 = smul.addr %s152, 2
      %s156 = sadd.s32 %s154, %s155
      %s157 = smul.addr %s156, 8
      %s158 = scalar_lea.vmem %s0, %s157
      %p159 = pneg %p48
      %p160 = pneg %p45
      %p161 = scmp.lt.s32.totalorder %s17, 1
      %s162 = scalar_select %p161, %s17, 1
      %p163 = scmp.lt.s32.totalorder %s18, 0
      %s164 = scalar_select %p163, %s18, 0
      %s165 = sadd.s32 %s164, %s162
      %s166 = smul.addr %s165, 8
      %s167 = scalar_lea.vmem %s1, %s166
      %p168 = pneg %p76
      %p169 = pneg %p73
      %p170 = pneg %p104
      %p171 = pneg %p101
      %p172 = scmp.lt.s32.totalorder %s17, 1
      %s173 = scalar_select %p172, %s17, 1
      %p174 = scmp.lt.s32.totalorder %s18, 0
      %s175 = scalar_select %p174, %s18, 0
      %s176 = smul.addr %s173, 2
      %s177 = sadd.s32 %s175, %s176
      %s178 = smul.addr %s177, 8
      %s179 = scalar_lea.vmem %s2, %s178
      %p180 = scmp.lt.s32.totalorder %s17, 1
      %s181 = scalar_select %p180, %s17, 1
      %p182 = scmp.lt.s32.totalorder %s18, 0
      %s183 = scalar_select %p182, %s18, 0
      %s184 = smul.addr %s181, 2
      %s185 = sadd.s32 %s183, %s184
      %s186 = smul.addr %s185, 8
      %s187 = scalar_lea.vmem %s0, %s186
      %p188 = scmp.lt.s32.totalorder %s17, 1
      %s189 = scalar_select %p188, %s17, 1
      %p190 = scmp.lt.s32.totalorder %s18, 0
      %s191 = scalar_select %p190, %s18, 0
      %s192 = sadd.s32 %s191, %s189
      %s193 = smul.addr %s192, 8
      %s194 = scalar_lea.vmem %s1, %s193
      %p195 = scmp.lt.s32.totalorder %s17, 1
      %s196 = scalar_select %p195, %s17, 1
      %p197 = scmp.lt.s32.totalorder %s18, 0
      %s198 = scalar_select %p197, %s18, 0
      %s199 = smul.addr %s196, 2
      %s200 = sadd.s32 %s198, %s199
      %s201 = smul.addr %s200, 8
      %s202 = scalar_lea.vmem %s2, %s201
      %v203 = vld [vmem:[%s187] sm:$0xff]
      %v204 = vld [vmem:[%s187 + $0x8] sm:$0xff]
      %v205 = vmul.f32 %v203, 0.25
      %v206 = vmul.f32 %v204, 0.25
      %v207 = vld [vmem:[%s194] sm:$0xff]
      %vm208 = vcmask 130048
      %v210 = vsel %vm208, %v205, 0
      %v213 = vsel %vm208, %v206, 0
      %v216 = vsel %vm208, %v207, 0
      %218 = vmatprep.subr.mxu0 0.0
      %219 = vmatpush1.xpose.msra.mxu0 %v216
      %220 = vmatprep.subr.mxu0 0.0
      %221 = vmatpush1.xpose.msra.mxu0 0.0
      %222 = vmatprep.subr.mxu0 0.0
      %223 = vmatpush1.xpose.msra.mxu0 0.0
      %224 = vmatprep.subr.mxu0 0.0
      %225 = vmatpush1.xpose.msra.mxu0 0.0
      %226 = vmatprep.subr.mxu0 0.0
      %227 = vmatpush1.xpose.msra.mxu0 0.0
      %228 = vmatprep.subr.mxu0 0.0
      %229 = vmatpush1.xpose.msra.mxu0 0.0
      %230 = vmatprep.subr.mxu0 0.0
      %231 = vmatpush1.xpose.msra.mxu0 0.0
      %232 = vmatprep.subr.mxu0 0.0
      %233 = vmatpush1.xpose.msra.mxu0 0.0
      %234 = vmatprep.subr.mxu0 0.0
      %235 = vmatpush1.xpose.msra.mxu0 0.0
      %236 = vmatprep.subr.mxu0 0.0
      %237 = vmatpush1.xpose.msra.mxu0 0.0
      %238 = vmatprep.subr.mxu0 0.0
      %239 = vmatpush1.xpose.msra.mxu0 0.0
      %240 = vmatprep.subr.mxu0 0.0
      %241 = vmatpush1.xpose.msra.mxu0 0.0
      %242 = vmatprep.subr.mxu0 0.0
      %243 = vmatpush1.xpose.msra.mxu0 0.0
      %244 = vmatprep.subr.mxu0 0.0
      %245 = vmatpush1.xpose.msra.mxu0 0.0
      %246 = vmatprep.subr.mxu0 0.0
      %247 = vmatpush1.xpose.msra.mxu0 0.0
      %248 = vmatprep.subr.mxu0 0.0
      %249 = vmatpush1.xpose.msra.mxu0 0.0
      %250 = vmatprep.subr.mxu0 0.0
      %251 = vmatpush1.xpose.msra.mxu0 0.0
      %252 = vmatprep.subr.mxu0 0.0
      %253 = vmatpush1.xpose.msra.mxu0 0.0
      %254 = vmatprep.subr.mxu0 0.0
      %255 = vmatpush1.xpose.msra.mxu0 0.0
      %256 = vmatprep.subr.mxu0 0.0
      %257 = vmatpush1.xpose.msra.mxu0 0.0
      %258 = vmatprep.subr.mxu0 0.0
      %259 = vmatpush1.xpose.msra.mxu0 0.0
      %260 = vmatprep.subr.mxu0 0.0
      %261 = vmatpush1.xpose.msra.mxu0 0.0
      %262 = vmatprep.subr.mxu0 0.0
      %263 = vmatpush1.xpose.msra.mxu0 0.0
      %264 = vmatprep.subr.mxu0 0.0
      %265 = vmatpush1.xpose.msra.mxu0 0.0
      %266 = vmatprep.subr.mxu0 0.0
      %267 = vmatpush1.xpose.msra.mxu0 0.0
      %268 = vmatprep.subr.mxu0 0.0
      %269 = vmatpush1.xpose.msra.mxu0 0.0
      %270 = vmatprep.subr.mxu0 0.0
      %271 = vmatpush1.xpose.msra.mxu0 0.0
      %272 = vmatprep.subr.mxu0 0.0
      %273 = vmatpush1.xpose.msra.mxu0 0.0
      %274 = vmatprep.subr.mxu0 0.0
      %275 = vmatpush1.xpose.msra.mxu0 0.0
      %276 = vmatprep.subr.mxu0 0.0
      %277 = vmatpush1.xpose.msra.mxu0 0.0
      %278 = vmatprep.subr.mxu0 0.0
      %279 = vmatpush1.xpose.msra.mxu0 0.0
      %280 = vmatprep.subr.mxu0 0.0
      %281 = vmatpush1.xpose.msra.mxu0 0.0
      %282 = vmatprep.mubr.f32.mxu0 0.0
      %283 = vmatmul.mubr.f32.gmra.mrb[0].mxu0 %v210
      %v284 = vpop.f32.mrb[0].mxu0
      %v285 = vadd.f32 0.0, %v284
      %v286 = vpop.f32.mrb[0].mxu0
      %287 = vmatprep.mubr.f32.mxu0 0.0
      %288 = vmatmul.mubr.f32.gmra.mrb[0].mxu0 %v213
      %v289 = vpop.f32.mrb[0].mxu0
      %v290 = vadd.f32 0.0, %v289
      %v291 = vpop.f32.mrb[0].mxu0
      %292 = vdwg.mxu0
      %vm293 = vcmask 64512
      %v294 = vsel %vm293, %v285, -inf
      %295 = vmax.xlane.f32.xlu0 %v294
      %v296 = vpop.xlane.xlu0 %295
      %v297 = vsel %vm293, %v290, -inf
      %298 = vmax.xlane.f32.xlu0 %v297
      %v299 = vpop.xlane.xlu0 %298
      %v300 = vsub.f32 %v285, %v296
      %v301 = vsub.f32 %v290, %v299
      %v302 = vmul.f32 %v300, 1.442695
      %v303 = vpow.pop %v302
      %v304 = vmul.f32 %v301, 1.442695
      %v305 = vpow.pop %v304
      %v306 = vsel %vm293, %v303, 0.0
      %307 = vadd.xlane.f32.xlu0 %v306
      %v308 = vpop.xlane.xlu0 %307
      %v309 = vsel %vm293, %v305, 0.0
      %310 = vadd.xlane.f32.xlu0 %v309
      %v311 = vpop.xlane.xlu0 %310
      %v312 = vrcp.pop %v308
      %v313 = vrcp.pop %v311
      %v314 = vmul.f32 %v303, %v312
      %v315 = vmul.f32 %v305, %v313
      %316 = vrot.lane.b32.xlu0 %v207, 112
      %v317 = vpop.permute.xlu0 %316
      %v320 = vsel %vm293, %v314, 0
      %v323 = vsel %vm293, %v315, 0
      %325 = vmatprep.subr.mxu0 0.0
      %326 = vmatpush1.msra.mxu0 %v317
      %327 = vmatprep.subr.mxu0 0.0
      %328 = vmatpush1.msra.mxu0 0.0
      %329 = vmatprep.subr.mxu0 0.0
      %330 = vmatpush1.msra.mxu0 0.0
      %331 = vmatprep.subr.mxu0 0.0
      %332 = vmatpush1.msra.mxu0 0.0
      %333 = vmatprep.subr.mxu0 0.0
      %334 = vmatpush1.msra.mxu0 0.0
      %335 = vmatprep.subr.mxu0 0.0
      %336 = vmatpush1.msra.mxu0 0.0
      %337 = vmatprep.subr.mxu0 0.0
      %338 = vmatpush1.msra.mxu0 0.0
      %339 = vmatprep.subr.mxu0 0.0
      %340 = vmatpush1.msra.mxu0 0.0
      %341 = vmatprep.subr.mxu0 0.0
      %342 = vmatpush1.msra.mxu0 0.0
      %343 = vmatprep.subr.mxu0 0.0
      %344 = vmatpush1.msra.mxu0 0.0
      %345 = vmatprep.subr.mxu0 0.0
      %346 = vmatpush1.msra.mxu0 0.0
      %347 = vmatprep.subr.mxu0 0.0
      %348 = vmatpush1.msra.mxu0 0.0
      %349 = vmatprep.subr.mxu0 0.0
      %350 = vmatpush1.msra.mxu0 0.0
      %351 = vmatprep.subr.mxu0 0.0
      %352 = vmatpush1.msra.mxu0 0.0
      %353 = vmatprep.subr.mxu0 0.0
      %354 = vmatpush1.msra.mxu0 0.0
      %355 = vmatprep.subr.mxu0 0.0
      %356 = vmatpush1.msra.mxu0 0.0
      %357 = vmatprep.subr.mxu0 0.0
      %358 = vmatpush1.msra.mxu0 0.0
      %359 = vmatprep.subr.mxu0 0.0
      %360 = vmatpush1.msra.mxu0 0.0
      %361 = vmatprep.subr.mxu0 0.0
      %362 = vmatpush1.msra.mxu0 0.0
      %363 = vmatprep.subr.mxu0 0.0
      %364 = vmatpush1.msra.mxu0 0.0
      %365 = vmatprep.subr.mxu0 0.0
      %366 = vmatpush1.msra.mxu0 0.0
      %367 = vmatprep.subr.mxu0 0.0
      %368 = vmatpush1.msra.mxu0 0.0
      %369 = vmatprep.subr.mxu0 0.0
      %370 = vmatpush1.msra.mxu0 0.0
      %371 = vmatprep.subr.mxu0 0.0
      %372 = vmatpush1.msra.mxu0 0.0
      %373 = vmatprep.subr.mxu0 0.0
      %374 = vmatpush1.msra.mxu0 0.0
      %375 = vmatprep.subr.mxu0 0.0
      %376 = vmatpush1.msra.mxu0 0.0
      %377 = vmatprep.subr.mxu0 0.0
      %378 = vmatpush1.msra.mxu0 0.0
      %379 = vmatprep.subr.mxu0 0.0
      %380 = vmatpush1.msra.mxu0 0.0
      %381 = vmatprep.subr.mxu0 0.0
      %382 = vmatpush1.msra.mxu0 0.0
      %383 = vmatprep.subr.mxu0 0.0
      %384 = vmatpush1.msra.mxu0 0.0
      %385 = vmatprep.subr.mxu0 0.0
      %386 = vmatpush1.msra.mxu0 0.0
      %387 = vmatprep.subr.mxu0 0.0
      %388 = vmatpush1.msra.mxu0 0.0
      %389 = vmatprep.mubr.f32.mxu0 0.0
      %390 = vmatmul.mubr.f32.gmra.mrb[0].mxu0 %v320
      %v391 = vpop.f32.mrb[0].mxu0
      %v392 = vadd.f32 0.0, %v391
      %v393 = vpop.f32.mrb[0].mxu0
      %394 = vmatprep.mubr.f32.mxu0 0.0
      %395 = vmatmul.mubr.f32.gmra.mrb[0].mxu0 %v323
      %v396 = vpop.f32.mrb[0].mxu0
      %v397 = vadd.f32 0.0, %v396
      %v398 = vpop.f32.mrb[0].mxu0
      %399 = vdwg.mxu0
      %400 = vrot.lane.b32.xlu0 %v205, 112
      %v401 = vpop.permute.xlu0 %400
      %402 = vrot.lane.b32.xlu0 %v206, 112
      %v403 = vpop.permute.xlu0 %402
      %404 = vrot.lane.b32.xlu0 %v207, 96
      %v405 = vpop.permute.xlu0 %404
      %v406 = vsel %vm208, %v401, 0
      %v408 = vsel %vm208, %v403, 0
      %v410 = vsel %vm208, %v405, 0
      %412 = vmatprep.subr.mxu0 0.0
      %413 = vmatpush1.xpose.msra.mxu0 %v410
      %414 = vmatprep.subr.mxu0 0.0
      %415 = vmatpush1.xpose.msra.mxu0 0.0
      %416 = vmatprep.subr.mxu0 0.0
      %417 = vmatpush1.xpose.msra.mxu0 0.0
      %418 = vmatprep.subr.mxu0 0.0
      %419 = vmatpush1.xpose.msra.mxu0 0.0
      %420 = vmatprep.subr.mxu0 0.0
      %421 = vmatpush1.xpose.msra.mxu0 0.0
      %422 = vmatprep.subr.mxu0 0.0
      %423 = vmatpush1.xpose.msra.mxu0 0.0
      %424 = vmatprep.subr.mxu0 0.0
      %425 = vmatpush1.xpose.msra.mxu0 0.0
      %426 = vmatprep.subr.mxu0 0.0
      %427 = vmatpush1.xpose.msra.mxu0 0.0
      %428 = vmatprep.subr.mxu0 0.0
      %429 = vmatpush1.xpose.msra.mxu0 0.0
      %430 = vmatprep.subr.mxu0 0.0
      %431 = vmatpush1.xpose.msra.mxu0 0.0
      %432 = vmatprep.subr.mxu0 0.0
      %433 = vmatpush1.xpose.msra.mxu0 0.0
      %434 = vmatprep.subr.mxu0 0.0
      %435 = vmatpush1.xpose.msra.mxu0 0.0
      %436 = vmatprep.subr.mxu0 0.0
      %437 = vmatpush1.xpose.msra.mxu0 0.0
      %438 = vmatprep.subr.mxu0 0.0
      %439 = vmatpush1.xpose.msra.mxu0 0.0
      %440 = vmatprep.subr.mxu0 0.0
      %441 = vmatpush1.xpose.msra.mxu0 0.0
      %442 = vmatprep.subr.mxu0 0.0
      %443 = vmatpush1.xpose.msra.mxu0 0.0
      %444 = vmatprep.subr.mxu0 0.0
      %445 = vmatpush1.xpose.msra.mxu0 0.0
      %446 = vmatprep.subr.mxu0 0.0
      %447 = vmatpush1.xpose.msra.mxu0 0.0
      %448 = vmatprep.subr.mxu0 0.0
      %449 = vmatpush1.xpose.msra.mxu0 0.0
      %450 = vmatprep.subr.mxu0 0.0
      %451 = vmatpush1.xpose.msra.mxu0 0.0
      %452 = vmatprep.subr.mxu0 0.0
      %453 = vmatpush1.xpose.msra.mxu0 0.0
      %454 = vmatprep.subr.mxu0 0.0
      %455 = vmatpush1.xpose.msra.mxu0 0.0
      %456 = vmatprep.subr.mxu0 0.0
      %457 = vmatpush1.xpose.msra.mxu0 0.0
      %458 = vmatprep.subr.mxu0 0.0
      %459 = vmatpush1.xpose.msra.mxu0 0.0
      %460 = vmatprep.subr.mxu0 0.0
      %461 = vmatpush1.xpose.msra.mxu0 0.0
      %462 = vmatprep.subr.mxu0 0.0
      %463 = vmatpush1.xpose.msra.mxu0 0.0
      %464 = vmatprep.subr.mxu0 0.0
      %465 = vmatpush1.xpose.msra.mxu0 0.0
      %466 = vmatprep.subr.mxu0 0.0
      %467 = vmatpush1.xpose.msra.mxu0 0.0
      %468 = vmatprep.subr.mxu0 0.0
      %469 = vmatpush1.xpose.msra.mxu0 0.0
      %470 = vmatprep.subr.mxu0 0.0
      %471 = vmatpush1.xpose.msra.mxu0 0.0
      %472 = vmatprep.subr.mxu0 0.0
      %473 = vmatpush1.xpose.msra.mxu0 0.0
      %474 = vmatprep.subr.mxu0 0.0
      %475 = vmatpush1.xpose.msra.mxu0 0.0
      %476 = vmatprep.mubr.f32.mxu0 0.0
      %477 = vmatmul.mubr.f32.gmra.mrb[0].mxu0 %v406
      %v478 = vpop.f32.mrb[0].mxu0
      %v479 = vadd.f32 0.0, %v478
      %v480 = vpop.f32.mrb[0].mxu0
      %481 = vmatprep.mubr.f32.mxu0 0.0
      %482 = vmatmul.mubr.f32.gmra.mrb[0].mxu0 %v408
      %v483 = vpop.f32.mrb[0].mxu0
      %v484 = vadd.f32 0.0, %v483
      %v485 = vpop.f32.mrb[0].mxu0
      %486 = vdwg.mxu0
      %v487 = vsel %vm293, %v479, -inf
      %488 = vmax.xlane.f32.xlu0 %v487
      %v489 = vpop.xlane.xlu0 %488
      %v490 = vsel %vm293, %v484, -inf
      %491 = vmax.xlane.f32.xlu0 %v490
      %v492 = vpop.xlane.xlu0 %491
      %v493 = vsub.f32 %v479, %v489
      %v494 = vsub.f32 %v484, %v492
      %v495 = vmul.f32 %v493, 1.442695
      %v496 = vpow.pop %v495
      %v497 = vmul.f32 %v494, 1.442695
      %v498 = vpow.pop %v497
      %v499 = vsel %vm293, %v496, 0.0
      %500 = vadd.xlane.f32.xlu0 %v499
      %v501 = vpop.xlane.xlu0 %500
      %v502 = vsel %vm293, %v498, 0.0
      %503 = vadd.xlane.f32.xlu0 %v502
      %v504 = vpop.xlane.xlu0 %503
      %v505 = vrcp.pop %v501
      %v506 = vrcp.pop %v504
      %v507 = vmul.f32 %v496, %v505
      %v508 = vmul.f32 %v498, %v506
      %509 = vrot.lane.b32.xlu0 %v207, 80
      %v510 = vpop.permute.xlu0 %509
      %v513 = vsel %vm293, %v507, 0
      %v516 = vsel %vm293, %v508, 0
      %518 = vmatprep.subr.mxu0 0.0
      %519 = vmatpush1.msra.mxu0 %v510
      %520 = vmatprep.subr.mxu0 0.0
      %521 = vmatpush1.msra.mxu0 0.0
      %522 = vmatprep.subr.mxu0 0.0
      %523 = vmatpush1.msra.mxu0 0.0
      %524 = vmatprep.subr.mxu0 0.0
      %525 = vmatpush1.msra.mxu0 0.0
      %526 = vmatprep.subr.mxu0 0.0
      %527 = vmatpush1.msra.mxu0 0.0
      %528 = vmatprep.subr.mxu0 0.0
      %529 = vmatpush1.msra.mxu0 0.0
      %530 = vmatprep.subr.mxu0 0.0
      %531 = vmatpush1.msra.mxu0 0.0
      %532 = vmatprep.subr.mxu0 0.0
      %533 = vmatpush1.msra.mxu0 0.0
      %534 = vmatprep.subr.mxu0 0.0
      %535 = vmatpush1.msra.mxu0 0.0
      %536 = vmatprep.subr.mxu0 0.0
      %537 = vmatpush1.msra.mxu0 0.0
      %538 = vmatprep.subr.mxu0 0.0
      %539 = vmatpush1.msra.mxu0 0.0
      %540 = vmatprep.subr.mxu0 0.0
      %541 = vmatpush1.msra.mxu0 0.0
      %542 = vmatprep.subr.mxu0 0.0
      %543 = vmatpush1.msra.mxu0 0.0
      %544 = vmatprep.subr.mxu0 0.0
      %545 = vmatpush1.msra.mxu0 0.0
      %546 = vmatprep.subr.mxu0 0.0
      %547 = vmatpush1.msra.mxu0 0.0
      %548 = vmatprep.subr.mxu0 0.0
      %549 = vmatpush1.msra.mxu0 0.0
      %550 = vmatprep.subr.mxu0 0.0
      %551 = vmatpush1.msra.mxu0 0.0
      %552 = vmatprep.subr.mxu0 0.0
      %553 = vmatpush1.msra.mxu0 0.0
      %554 = vmatprep.subr.mxu0 0.0
      %555 = vmatpush1.msra.mxu0 0.0
      %556 = vmatprep.subr.mxu0 0.0
      %557 = vmatpush1.msra.mxu0 0.0
      %558 = vmatprep.subr.mxu0 0.0
      %559 = vmatpush1.msra.mxu0 0.0
      %560 = vmatprep.subr.mxu0 0.0
      %561 = vmatpush1.msra.mxu0 0.0
      %562 = vmatprep.subr.mxu0 0.0
      %563 = vmatpush1.msra.mxu0 0.0
      %564 = vmatprep.subr.mxu0 0.0
      %565 = vmatpush1.msra.mxu0 0.0
      %566 = vmatprep.subr.mxu0 0.0
      %567 = vmatpush1.msra.mxu0 0.0
      %568 = vmatprep.subr.mxu0 0.0
      %569 = vmatpush1.msra.mxu0 0.0
      %570 = vmatprep.subr.mxu0 0.0
      %571 = vmatpush1.msra.mxu0 0.0
      %572 = vmatprep.subr.mxu0 0.0
      %573 = vmatpush1.msra.mxu0 0.0
      %574 = vmatprep.subr.mxu0 0.0
      %575 = vmatpush1.msra.mxu0 0.0
      %576 = vmatprep.subr.mxu0 0.0
      %577 = vmatpush1.msra.mxu0 0.0
      %578 = vmatprep.subr.mxu0 0.0
      %579 = vmatpush1.msra.mxu0 0.0
      %580 = vmatprep.subr.mxu0 0.0
      %581 = vmatpush1.msra.mxu0 0.0
      %582 = vmatprep.mubr.f32.mxu0 0.0
      %583 = vmatmul.mubr.f32.gmra.mrb[0].mxu0 %v513
      %v584 = vpop.f32.mrb[0].mxu0
      %v585 = vadd.f32 0.0, %v584
      %v586 = vpop.f32.mrb[0].mxu0
      %587 = vmatprep.mubr.f32.mxu0 0.0
      %588 = vmatmul.mubr.f32.gmra.mrb[0].mxu0 %v516
      %v589 = vpop.f32.mrb[0].mxu0
      %v590 = vadd.f32 0.0, %v589
      %v591 = vpop.f32.mrb[0].mxu0
      %592 = vdwg.mxu0
      %593 = vrot.lane.b32.xlu0 %v205, 96
      %v594 = vpop.permute.xlu0 %593
      %595 = vrot.lane.b32.xlu0 %v206, 96
      %v596 = vpop.permute.xlu0 %595
      %597 = vrot.lane.b32.xlu0 %v207, 64
      %v598 = vpop.permute.xlu0 %597
      %v599 = vsel %vm208, %v594, 0
      %v601 = vsel %vm208, %v596, 0
      %v603 = vsel %vm208, %v598, 0
      %605 = vmatprep.subr.mxu0 0.0
      %606 = vmatpush1.xpose.msra.mxu0 %v603
      %607 = vmatprep.subr.mxu0 0.0
      %608 = vmatpush1.xpose.msra.mxu0 0.0
      %609 = vmatprep.subr.mxu0 0.0
      %610 = vmatpush1.xpose.msra.mxu0 0.0
      %611 = vmatprep.subr.mxu0 0.0
      %612 = vmatpush1.xpose.msra.mxu0 0.0
      %613 = vmatprep.subr.mxu0 0.0
      %614 = vmatpush1.xpose.msra.mxu0 0.0
      %615 = vmatprep.subr.mxu0 0.0
      %616 = vmatpush1.xpose.msra.mxu0 0.0
      %617 = vmatprep.subr.mxu0 0.0
      %618 = vmatpush1.xpose.msra.mxu0 0.0
      %619 = vmatprep.subr.mxu0 0.0
      %620 = vmatpush1.xpose.msra.mxu0 0.0
      %621 = vmatprep.subr.mxu0 0.0
      %622 = vmatpush1.xpose.msra.mxu0 0.0
      %623 = vmatprep.subr.mxu0 0.0
      %624 = vmatpush1.xpose.msra.mxu0 0.0
      %625 = vmatprep.subr.mxu0 0.0
      %626 = vmatpush1.xpose.msra.mxu0 0.0
      %627 = vmatprep.subr.mxu0 0.0
      %628 = vmatpush1.xpose.msra.mxu0 0.0
      %629 = vmatprep.subr.mxu0 0.0
      %630 = vmatpush1.xpose.msra.mxu0 0.0
      %631 = vmatprep.subr.mxu0 0.0
      %632 = vmatpush1.xpose.msra.mxu0 0.0
      %633 = vmatprep.subr.mxu0 0.0
      %634 = vmatpush1.xpose.msra.mxu0 0.0
      %635 = vmatprep.subr.mxu0 0.0
      %636 = vmatpush1.xpose.msra.mxu0 0.0
      %637 = vmatprep.subr.mxu0 0.0
      %638 = vmatpush1.xpose.msra.mxu0 0.0
      %639 = vmatprep.subr.mxu0 0.0
      %640 = vmatpush1.xpose.msra.mxu0 0.0
      %641 = vmatprep.subr.mxu0 0.0
      %642 = vmatpush1.xpose.msra.mxu0 0.0
      %643 = vmatprep.subr.mxu0 0.0
      %644 = vmatpush1.xpose.msra.mxu0 0.0
      %645 = vmatprep.subr.mxu0 0.0
      %646 = vmatpush1.xpose.msra.mxu0 0.0
      %647 = vmatprep.subr.mxu0 0.0
      %648 = vmatpush1.xpose.msra.mxu0 0.0
      %649 = vmatprep.subr.mxu0 0.0
      %650 = vmatpush1.xpose.msra.mxu0 0.0
      %651 = vmatprep.subr.mxu0 0.0
      %652 = vmatpush1.xpose.msra.mxu0 0.0
      %653 = vmatprep.subr.mxu0 0.0
      %654 = vmatpush1.xpose.msra.mxu0 0.0
      %655 = vmatprep.subr.mxu0 0.0
      %656 = vmatpush1.xpose.msra.mxu0 0.0
      %657 = vmatprep.subr.mxu0 0.0
      %658 = vmatpush1.xpose.msra.mxu0 0.0
      %659 = vmatprep.subr.mxu0 0.0
      %660 = vmatpush1.xpose.msra.mxu0 0.0
      %661 = vmatprep.subr.mxu0 0.0
      %662 = vmatpush1.xpose.msra.mxu0 0.0
      %663 = vmatprep.subr.mxu0 0.0
      %664 = vmatpush1.xpose.msra.mxu0 0.0
      %665 = vmatprep.subr.mxu0 0.0
      %666 = vmatpush1.xpose.msra.mxu0 0.0
      %667 = vmatprep.subr.mxu0 0.0
      %668 = vmatpush1.xpose.msra.mxu0 0.0
      %669 = vmatprep.mubr.f32.mxu0 0.0
      %670 = vmatmul.mubr.f32.gmra.mrb[0].mxu0 %v599
      %v671 = vpop.f32.mrb[0].mxu0
      %v672 = vadd.f32 0.0, %v671
      %v673 = vpop.f32.mrb[0].mxu0
      %674 = vmatprep.mubr.f32.mxu0 0.0
      %675 = vmatmul.mubr.f32.gmra.mrb[0].mxu0 %v601
      %v676 = vpop.f32.mrb[0].mxu0
      %v677 = vadd.f32 0.0, %v676
      %v678 = vpop.f32.mrb[0].mxu0
      %679 = vdwg.mxu0
      %v680 = vsel %vm293, %v672, -inf
      %681 = vmax.xlane.f32.xlu0 %v680
      %v682 = vpop.xlane.xlu0 %681
      %v683 = vsel %vm293, %v677, -inf
      %684 = vmax.xlane.f32.xlu0 %v683
      %v685 = vpop.xlane.xlu0 %684
      %v686 = vsub.f32 %v672, %v682
      %v687 = vsub.f32 %v677, %v685
      %v688 = vmul.f32 %v686, 1.442695
      %v689 = vpow.pop %v688
      %v690 = vmul.f32 %v687, 1.442695
      %v691 = vpow.pop %v690
      %v692 = vsel %vm293, %v689, 0.0
      %693 = vadd.xlane.f32.xlu0 %v692
      %v694 = vpop.xlane.xlu0 %693
      %v695 = vsel %vm293, %v691, 0.0
      %696 = vadd.xlane.f32.xlu0 %v695
      %v697 = vpop.xlane.xlu0 %696
      %v698 = vrcp.pop %v694
      %v699 = vrcp.pop %v697
      %v700 = vmul.f32 %v689, %v698
      %v701 = vmul.f32 %v691, %v699
      %702 = vrot.lane.b32.xlu0 %v207, 48
      %v703 = vpop.permute.xlu0 %702
      %v706 = vsel %vm293, %v700, 0
      %v709 = vsel %vm293, %v701, 0
      %711 = vmatprep.subr.mxu0 0.0
      %712 = vmatpush1.msra.mxu0 %v703
      %713 = vmatprep.subr.mxu0 0.0
      %714 = vmatpush1.msra.mxu0 0.0
      %715 = vmatprep.subr.mxu0 0.0
      %716 = vmatpush1.msra.mxu0 0.0
      %717 = vmatprep.subr.mxu0 0.0
      %718 = vmatpush1.msra.mxu0 0.0
      %719 = vmatprep.subr.mxu0 0.0
      %720 = vmatpush1.msra.mxu0 0.0
      %721 = vmatprep.subr.mxu0 0.0
      %722 = vmatpush1.msra.mxu0 0.0
      %723 = vmatprep.subr.mxu0 0.0
      %724 = vmatpush1.msra.mxu0 0.0
      %725 = vmatprep.subr.mxu0 0.0
      %726 = vmatpush1.msra.mxu0 0.0
      %727 = vmatprep.subr.mxu0 0.0
      %728 = vmatpush1.msra.mxu0 0.0
      %729 = vmatprep.subr.mxu0 0.0
      %730 = vmatpush1.msra.mxu0 0.0
      %731 = vmatprep.subr.mxu0 0.0
      %732 = vmatpush1.msra.mxu0 0.0
      %733 = vmatprep.subr.mxu0 0.0
      %734 = vmatpush1.msra.mxu0 0.0
      %735 = vmatprep.subr.mxu0 0.0
      %736 = vmatpush1.msra.mxu0 0.0
      %737 = vmatprep.subr.mxu0 0.0
      %738 = vmatpush1.msra.mxu0 0.0
      %739 = vmatprep.subr.mxu0 0.0
      %740 = vmatpush1.msra.mxu0 0.0
      %741 = vmatprep.subr.mxu0 0.0
      %742 = vmatpush1.msra.mxu0 0.0
      %743 = vmatprep.subr.mxu0 0.0
      %744 = vmatpush1.msra.mxu0 0.0
      %745 = vmatprep.subr.mxu0 0.0
      %746 = vmatpush1.msra.mxu0 0.0
      %747 = vmatprep.subr.mxu0 0.0
      %748 = vmatpush1.msra.mxu0 0.0
      %749 = vmatprep.subr.mxu0 0.0
      %750 = vmatpush1.msra.mxu0 0.0
      %751 = vmatprep.subr.mxu0 0.0
      %752 = vmatpush1.msra.mxu0 0.0
      %753 = vmatprep.subr.mxu0 0.0
      %754 = vmatpush1.msra.mxu0 0.0
      %755 = vmatprep.subr.mxu0 0.0
      %756 = vmatpush1.msra.mxu0 0.0
      %757 = vmatprep.subr.mxu0 0.0
      %758 = vmatpush1.msra.mxu0 0.0
      %759 = vmatprep.subr.mxu0 0.0
      %760 = vmatpush1.msra.mxu0 0.0
      %761 = vmatprep.subr.mxu0 0.0
      %762 = vmatpush1.msra.mxu0 0.0
      %763 = vmatprep.subr.mxu0 0.0
      %764 = vmatpush1.msra.mxu0 0.0
      %765 = vmatprep.subr.mxu0 0.0
      %766 = vmatpush1.msra.mxu0 0.0
      %767 = vmatprep.subr.mxu0 0.0
      %768 = vmatpush1.msra.mxu0 0.0
      %769 = vmatprep.subr.mxu0 0.0
      %770 = vmatpush1.msra.mxu0 0.0
      %771 = vmatprep.subr.mxu0 0.0
      %772 = vmatpush1.msra.mxu0 0.0
      %773 = vmatprep.subr.mxu0 0.0
      %774 = vmatpush1.msra.mxu0 0.0
      %775 = vmatprep.mubr.f32.mxu0 0.0
      %776 = vmatmul.mubr.f32.gmra.mrb[0].mxu0 %v706
      %v777 = vpop.f32.mrb[0].mxu0
      %v778 = vadd.f32 0.0, %v777
      %v779 = vpop.f32.mrb[0].mxu0
      %780 = vmatprep.mubr.f32.mxu0 0.0
      %781 = vmatmul.mubr.f32.gmra.mrb[0].mxu0 %v709
      %v782 = vpop.f32.mrb[0].mxu0
      %v783 = vadd.f32 0.0, %v782
      %v784 = vpop.f32.mrb[0].mxu0
      %785 = vdwg.mxu0
      %786 = vrot.lane.b32.xlu0 %v205, 80
      %v787 = vpop.permute.xlu0 %786
      %788 = vrot.lane.b32.xlu0 %v206, 80
      %v789 = vpop.permute.xlu0 %788
      %790 = vrot.lane.b32.xlu0 %v207, 32
      %v791 = vpop.permute.xlu0 %790
      %v792 = vsel %vm208, %v787, 0
      %v794 = vsel %vm208, %v789, 0
      %v796 = vsel %vm208, %v791, 0
      %798 = vmatprep.subr.mxu0 0.0
      %799 = vmatpush1.xpose.msra.mxu0 %v796
      %800 = vmatprep.subr.mxu0 0.0
      %801 = vmatpush1.xpose.msra.mxu0 0.0
      %802 = vmatprep.subr.mxu0 0.0
      %803 = vmatpush1.xpose.msra.mxu0 0.0
      %804 = vmatprep.subr.mxu0 0.0
      %805 = vmatpush1.xpose.msra.mxu0 0.0
      %806 = vmatprep.subr.mxu0 0.0
      %807 = vmatpush1.xpose.msra.mxu0 0.0
      %808 = vmatprep.subr.mxu0 0.0
      %809 = vmatpush1.xpose.msra.mxu0 0.0
      %810 = vmatprep.subr.mxu0 0.0
      %811 = vmatpush1.xpose.msra.mxu0 0.0
      %812 = vmatprep.subr.mxu0 0.0
      %813 = vmatpush1.xpose.msra.mxu0 0.0
      %814 = vmatprep.subr.mxu0 0.0
      %815 = vmatpush1.xpose.msra.mxu0 0.0
      %816 = vmatprep.subr.mxu0 0.0
      %817 = vmatpush1.xpose.msra.mxu0 0.0
      %818 = vmatprep.subr.mxu0 0.0
      %819 = vmatpush1.xpose.msra.mxu0 0.0
      %820 = vmatprep.subr.mxu0 0.0
      %821 = vmatpush1.xpose.msra.mxu0 0.0
      %822 = vmatprep.subr.mxu0 0.0
      %823 = vmatpush1.xpose.msra.mxu0 0.0
      %824 = vmatprep.subr.mxu0 0.0
      %825 = vmatpush1.xpose.msra.mxu0 0.0
      %826 = vmatprep.subr.mxu0 0.0
      %827 = vmatpush1.xpose.msra.mxu0 0.0
      %828 = vmatprep.subr.mxu0 0.0
      %829 = vmatpush1.xpose.msra.mxu0 0.0
      %830 = vmatprep.subr.mxu0 0.0
      %831 = vmatpush1.xpose.msra.mxu0 0.0
      %832 = vmatprep.subr.mxu0 0.0
      %833 = vmatpush1.xpose.msra.mxu0 0.0
      %834 = vmatprep.subr.mxu0 0.0
      %835 = vmatpush1.xpose.msra.mxu0 0.0
      %836 = vmatprep.subr.mxu0 0.0
      %837 = vmatpush1.xpose.msra.mxu0 0.0
      %838 = vmatprep.subr.mxu0 0.0
      %839 = vmatpush1.xpose.msra.mxu0 0.0
      %840 = vmatprep.subr.mxu0 0.0
      %841 = vmatpush1.xpose.msra.mxu0 0.0
      %842 = vmatprep.subr.mxu0 0.0
      %843 = vmatpush1.xpose.msra.mxu0 0.0
      %844 = vmatprep.subr.mxu0 0.0
      %845 = vmatpush1.xpose.msra.mxu0 0.0
      %846 = vmatprep.subr.mxu0 0.0
      %847 = vmatpush1.xpose.msra.mxu0 0.0
      %848 = vmatprep.subr.mxu0 0.0
      %849 = vmatpush1.xpose.msra.mxu0 0.0
      %850 = vmatprep.subr.mxu0 0.0
      %851 = vmatpush1.xpose.msra.mxu0 0.0
      %852 = vmatprep.subr.mxu0 0.0
      %853 = vmatpush1.xpose.msra.mxu0 0.0
      %854 = vmatprep.subr.mxu0 0.0
      %855 = vmatpush1.xpose.msra.mxu0 0.0
      %856 = vmatprep.subr.mxu0 0.0
      %857 = vmatpush1.xpose.msra.mxu0 0.0
      %858 = vmatprep.subr.mxu0 0.0
      %859 = vmatpush1.xpose.msra.mxu0 0.0
      %860 = vmatprep.subr.mxu0 0.0
      %861 = vmatpush1.xpose.msra.mxu0 0.0
      %862 = vmatprep.mubr.f32.mxu0 0.0
      %863 = vmatmul.mubr.f32.gmra.mrb[0].mxu0 %v792
      %v864 = vpop.f32.mrb[0].mxu0
      %v865 = vadd.f32 0.0, %v864
      %v866 = vpop.f32.mrb[0].mxu0
      %867 = vmatprep.mubr.f32.mxu0 0.0
      %868 = vmatmul.mubr.f32.gmra.mrb[0].mxu0 %v794
      %v869 = vpop.f32.mrb[0].mxu0
      %v870 = vadd.f32 0.0, %v869
      %v871 = vpop.f32.mrb[0].mxu0
      %872 = vdwg.mxu0
      %v873 = vsel %vm293, %v865, -inf
      %874 = vmax.xlane.f32.xlu0 %v873
      %v875 = vpop.xlane.xlu0 %874
      %v876 = vsel %vm293, %v870, -inf
      %877 = vmax.xlane.f32.xlu0 %v876
      %v878 = vpop.xlane.xlu0 %877
      %v879 = vsub.f32 %v865, %v875
      %v880 = vsub.f32 %v870, %v878
      %v881 = vmul.f32 %v879, 1.442695
      %v882 = vpow.pop %v881
      %v883 = vmul.f32 %v880, 1.442695
      %v884 = vpow.pop %v883
      %v885 = vsel %vm293, %v882, 0.0
      %886 = vadd.xlane.f32.xlu0 %v885
      %v887 = vpop.xlane.xlu0 %886
      %v888 = vsel %vm293, %v884, 0.0
      %889 = vadd.xlane.f32.xlu0 %v888
      %v890 = vpop.xlane.xlu0 %889
      %v891 = vrcp.pop %v887
      %v892 = vrcp.pop %v890
      %v893 = vmul.f32 %v882, %v891
      %v894 = vmul.f32 %v884, %v892
      %895 = vrot.lane.b32.xlu0 %v207, 16
      %v896 = vpop.permute.xlu0 %895
      %v899 = vsel %vm293, %v893, 0
      %v902 = vsel %vm293, %v894, 0
      %904 = vmatprep.subr.mxu0 0.0
      %905 = vmatpush1.msra.mxu0 %v896
      %906 = vmatprep.subr.mxu0 0.0
      %907 = vmatpush1.msra.mxu0 0.0
      %908 = vmatprep.subr.mxu0 0.0
      %909 = vmatpush1.msra.mxu0 0.0
      %910 = vmatprep.subr.mxu0 0.0
      %911 = vmatpush1.msra.mxu0 0.0
      %912 = vmatprep.subr.mxu0 0.0
      %913 = vmatpush1.msra.mxu0 0.0
      %914 = vmatprep.subr.mxu0 0.0
      %915 = vmatpush1.msra.mxu0 0.0
      %916 = vmatprep.subr.mxu0 0.0
      %917 = vmatpush1.msra.mxu0 0.0
      %918 = vmatprep.subr.mxu0 0.0
      %919 = vmatpush1.msra.mxu0 0.0
      %920 = vmatprep.subr.mxu0 0.0
      %921 = vmatpush1.msra.mxu0 0.0
      %922 = vmatprep.subr.mxu0 0.0
      %923 = vmatpush1.msra.mxu0 0.0
      %924 = vmatprep.subr.mxu0 0.0
      %925 = vmatpush1.msra.mxu0 0.0
      %926 = vmatprep.subr.mxu0 0.0
      %927 = vmatpush1.msra.mxu0 0.0
      %928 = vmatprep.subr.mxu0 0.0
      %929 = vmatpush1.msra.mxu0 0.0
      %930 = vmatprep.subr.mxu0 0.0
      %931 = vmatpush1.msra.mxu0 0.0
      %932 = vmatprep.subr.mxu0 0.0
      %933 = vmatpush1.msra.mxu0 0.0
      %934 = vmatprep.subr.mxu0 0.0
      %935 = vmatpush1.msra.mxu0 0.0
      %936 = vmatprep.subr.mxu0 0.0
      %937 = vmatpush1.msra.mxu0 0.0
      %938 = vmatprep.subr.mxu0 0.0
      %939 = vmatpush1.msra.mxu0 0.0
      %940 = vmatprep.subr.mxu0 0.0
      %941 = vmatpush1.msra.mxu0 0.0
      %942 = vmatprep.subr.mxu0 0.0
      %943 = vmatpush1.msra.mxu0 0.0
      %944 = vmatprep.subr.mxu0 0.0
      %945 = vmatpush1.msra.mxu0 0.0
      %946 = vmatprep.subr.mxu0 0.0
      %947 = vmatpush1.msra.mxu0 0.0
      %948 = vmatprep.subr.mxu0 0.0
      %949 = vmatpush1.msra.mxu0 0.0
      %950 = vmatprep.subr.mxu0 0.0
      %951 = vmatpush1.msra.mxu0 0.0
      %952 = vmatprep.subr.mxu0 0.0
      %953 = vmatpush1.msra.mxu0 0.0
      %954 = vmatprep.subr.mxu0 0.0
      %955 = vmatpush1.msra.mxu0 0.0
      %956 = vmatprep.subr.mxu0 0.0
      %957 = vmatpush1.msra.mxu0 0.0
      %958 = vmatprep.subr.mxu0 0.0
      %959 = vmatpush1.msra.mxu0 0.0
      %960 = vmatprep.subr.mxu0 0.0
      %961 = vmatpush1.msra.mxu0 0.0
      %962 = vmatprep.subr.mxu0 0.0
      %963 = vmatpush1.msra.mxu0 0.0
      %964 = vmatprep.subr.mxu0 0.0
      %965 = vmatpush1.msra.mxu0 0.0
      %966 = vmatprep.subr.mxu0 0.0
      %967 = vmatpush1.msra.mxu0 0.0
      %968 = vmatprep.mubr.f32.mxu0 0.0
      %969 = vmatmul.mubr.f32.gmra.mrb[0].mxu0 %v899
      %v970 = vpop.f32.mrb[0].mxu0
      %v971 = vadd.f32 0.0, %v970
      %v972 = vpop.f32.mrb[0].mxu0
      %973 = vmatprep.mubr.f32.mxu0 0.0
      %974 = vmatmul.mubr.f32.gmra.mrb[0].mxu0 %v902
      %v975 = vpop.f32.mrb[0].mxu0
      %v976 = vadd.f32 0.0, %v975
      %v977 = vpop.f32.mrb[0].mxu0
      %978 = vdwg.mxu0
      %981 = vrot.lane.b32.xlu0 %v585, 16
      %v982 = vpop.permute.xlu0 %981
      %983 = vrot.lane.b32.xlu0 %v590, 16
      %v984 = vpop.permute.xlu0 %983
      %989 = vrot.lane.b32.xlu0 %v778, 32
      %v990 = vpop.permute.xlu0 %989
      %991 = vrot.lane.b32.xlu0 %v783, 32
      %v992 = vpop.permute.xlu0 %991
      %997 = vrot.lane.b32.xlu0 %v971, 48
      %v998 = vpop.permute.xlu0 %997
      %999 = vrot.lane.b32.xlu0 %v976, 48
      %v1000 = vpop.permute.xlu0 %999
      %v1003 = vsel %vm208, %v392, %v982
      %v1004 = vsel %vm208, %v397, %v984
      %vm1005 = vcmask 261120
      %v1006 = vsel %vm1005, %v1003, %v990
      %v1007 = vsel %vm1005, %v1004, %v992
      %vm1008 = vcmask 392192
      %v1009 = vsel %vm1008, %v1006, %v998
      %v1010 = vsel %vm1008, %v1007, %v1000
      %vm1011 = vcmask 523264
      %1012 = vst.msk [vmem:[%s202] sm:$0xff] %vm1011, %v1009
      %1013 = vst.msk [vmem:[%s202 + $0x8] sm:$0xff] %vm1011, %v1010
      %p1014 = scmp.lt.s32.totalorder %s17, 1
      %s1015 = scalar_select %p1014, %s17, 1
      %p1016 = scmp.lt.s32.totalorder %s18, 0
      %s1017 = scalar_select %p1016, %s18, 0
      %s1018 = smul.addr %s1015, 2
      %s1019 = sadd.s32 %s1017, %s1018
      %s1020 = smul.addr %s1019, 8
      %s1021 = scalar_lea.vmem %s2, %s1020
      // Predicated region
      $region29: #{cross_attention_forward.6} parent=27 // pred_check
        %p1022 = pneg %p101
      $region30: #{cross_attention_forward.6} parent=27 // pred_check_branch
        %1024 = sbr.rel (%p1022) target = $region32
      $region31: #{cross_attention_forward.6} parent=27 // pred_region
        _
      $region32: #{cross_attention_forward.6} parent=27 // pred_fallthru
        _
    $region28: #{cross_attention_forward.6} parent=5 // pred_fallthru
      _
    %p1025 = scmp.le.s32.totalorder 2, %s8
    // Predicated region
    $region33: #{cross_attention_forward.6} parent=5 // pred_check
      %p1026 = pneg %p1025
    $region34: #{cross_attention_forward.6} parent=5 // pred_check_branch
      %1028 = sbr.rel (%p1026) target = $region36
    $region35: #{cross_attention_forward.6} parent=5 // pred_region
      %s1029 = ssub.s32 %s8, 2
      // Predicated region
      $region37: #{cross_attention_forward.6} parent=35 // pred_check
        %p1030 = pneg %p107
      $region38: #{cross_attention_forward.6} parent=35 // pred_check_branch
        %1032 = sbr.rel (%p1030) target = $region40
      $region39: #{cross_attention_forward.6} parent=35 // pred_region
        %p1033 = scmp.lt.s32.totalorder %s19, 1
        %s1034 = scalar_select %p1033, %s19, 1
        %p1035 = scmp.lt.s32.totalorder %s20, 0
        %s1036 = scalar_select %p1035, %s20, 0
        %s1037 = smul.addr %s1034, 2
        %s1038 = sadd.s32 %s1036, %s1037
        %s1039 = smul.addr %s1038, 8
        %s1040 = scalar_lea.vmem %s2, %s1039
      $region40: #{cross_attention_forward.6} parent=35 // pred_fallthru
        _
    $region36: #{cross_attention_forward.6} parent=5 // pred_fallthru
      _
  $region6: #{cross_attention_forward.6} parent=0 // loop_footer
    %s12 = sadd.s32 1, %s8
  $region7: #{cross_attention_forward.6} parent=0 // loop_footer_branch
    %7 = sbr.rel target = $region3
  $region8: #{cross_attention_forward.6} parent=0 // loop_exit
    _

// kernel: cross_attention_forward.7
$region0: #{cross_attention_forward.7}
  #allocation0 [shape = 'u32[]', space=smem, size = 0x4, offset = 0x4, fixed_abs, tag = 'smem constant byte address 0x4 - core index']
  #allocation1 [shape = 'u32[144,128]{1,0:T(1,128)}', space=vmem, size = 0x12000, scoped, tag = 'internal scratch']
  #allocation2 [shape = 'f32[32,32]{1,0:T(8,128)}', space=vmem, size = 0x4000, scoped, tag = 'scratch operand']
  %s0 = inlined_call_operand.vmem [shape: f32[32,64], index: 0, kind: input, shape index: {}]
  %s1 = inlined_call_operand.vmem [shape: f32[64,32], index: 1, kind: input, shape index: {}]
  %s2 = inlined_call_operand.vmem [shape: f32[1,32], index: 2, kind: input, shape index: {}]
  %s3 = inlined_call_operand.hbm [shape: f32[32,32], index: 3, kind: output, shape index: {}]
  %s4 = sld [smem:[#allocation0]]
  $region30: #{cross_attention_forward.7} parent=0
    _
  %s6 = ssub.s32 1, %s4
  %s7 = scalar_select 0, %s6, %s4
  $region1: #{cross_attention_forward.7} parent=0
    #allocation3 [shape = 'u8[16384]{0}', space=vmem, size = 0x4000, scoped, tag = 'output window, operand 0, single buffered']
    #allocation4 [shape = 's32[1]{0}', space=sflag, size = 0x4, scoped, tag = 'scoped memory for cross_attention_forward.7']
    %8 = vsyncpa [#allocation4], 0
    // Predicated region
    $region2: #{cross_attention_forward.7} parent=1 // pred_check
      _
    $region3: #{cross_attention_forward.7} parent=1 // pred_check_branch
      %10 = sbr.rel (0) target = $region5
    $region4: #{cross_attention_forward.7} parent=1 // pred_region
      _
    $region5: #{cross_attention_forward.7} parent=1 // pred_fallthru
      _
    // Predicated region
    $region6: #{cross_attention_forward.7} parent=1 // pred_check
      _
    $region7: #{cross_attention_forward.7} parent=1 // pred_check_branch
      %12 = sbr.rel (0) target = $region9
    $region8: #{cross_attention_forward.7} parent=1 // pred_region
      _
    $region9: #{cross_attention_forward.7} parent=1 // pred_fallthru
      _
    // Predicated region
    $region10: #{cross_attention_forward.7} parent=1 // pred_check
      _
    $region11: #{cross_attention_forward.7} parent=1 // pred_check_branch
      %14 = sbr.rel (0) target = $region13
    $region12: #{cross_attention_forward.7} parent=1 // pred_region
      _
    $region13: #{cross_attention_forward.7} parent=1 // pred_fallthru
      _
    %p15 = scmp.eq.s32.totalorder 0, 0
    // Predicated region
    $region14: #{cross_attention_forward.7} parent=1 // pred_check
      %p16 = pneg %p15
    $region15: #{cross_attention_forward.7} parent=1 // pred_check_branch
      %18 = sbr.rel (%p16) target = $region17
    $region16: #{cross_attention_forward.7} parent=1 // pred_region
      %vm19 = vcmask 261120
      %20 = vst.msk [vmem:[#allocation2] sm:$0xff] %vm19, 0.0
      %21 = vst.msk [vmem:[#allocation2 + $0x8] sm:$0xff] %vm19, 0.0
      %22 = vst.msk [vmem:[#allocation2 + $0x10] sm:$0xff] %vm19, 0.0
      %23 = vst.msk [vmem:[#allocation2 + $0x18] sm:$0xff] %vm19, 0.0
    $region17: #{cross_attention_forward.7} parent=1 // pred_fallthru
      _
    %v24 = vld [vmem:[#allocation2] sm:$0xff]
    %v25 = vld [vmem:[#allocation2 + $0x8] sm:$0xff]
    %v26 = vld [vmem:[#allocation2 + $0x10] sm:$0xff]
    %v27 = vld [vmem:[#allocation2 + $0x18] sm:$0xff]
    %v28 = vld [vmem:[%s0] sm:$0xff]
    %v29 = vld [vmem:[%s0 + $0x8] sm:$0xff]
    %v30 = vld [vmem:[%s0 + $0x10] sm:$0xff]
    %v31 = vld [vmem:[%s0 + $0x18] sm:$0xff]
    %v32 = vld [vmem:[%s1] sm:$0xff]
    %v33 = vld [vmem:[%s1 + $0x8] sm:$0xff]
    %v34 = vld [vmem:[%s1 + $0x10] sm:$0xff]
    %v35 = vld [vmem:[%s1 + $0x18] sm:$0xff]
    %v36 = vld [vmem:[%s1 + $0x20] sm:$0xff]
    %v37 = vld [vmem:[%s1 + $0x28] sm:$0xff]
    %v38 = vld [vmem:[%s1 + $0x30] sm:$0xff]
    %v39 = vld [vmem:[%s1 + $0x38] sm:$0xff]
    %vm40 = vcmask 523264
    %v42 = vsel %vm40, %v28, 0
    %v45 = vsel %vm40, %v29, 0
    %v48 = vsel %vm40, %v30, 0
    %v51 = vsel %vm40, %v31, 0
    %53 = vmatprep.subr.mxu0 0.0
    %54 = vmatpush1.msra.mxu0 %v32
    %55 = vmatprep.subr.mxu0 0.0
    %56 = vmatpush1.msra.mxu0 %v33
    %57 = vmatprep.subr.mxu0 0.0
    %58 = vmatpush1.msra.mxu0 %v34
    %59 = vmatprep.subr.mxu0 0.0
    %60 = vmatpush1.msra.mxu0 %v35
    %61 = vmatprep.subr.mxu0 0.0
    %62 = vmatpush1.msra.mxu0 %v36
    %63 = vmatprep.subr.mxu0 0.0
    %64 = vmatpush1.msra.mxu0 %v37
    %65 = vmatprep.subr.mxu0 0.0
    %66 = vmatpush1.msra.mxu0 %v38
    %67 = vmatprep.subr.mxu0 0.0
    %68 = vmatpush1.msra.mxu0 %v39
    %69 = vmatprep.subr.mxu0 0.0
    %70 = vmatpush1.msra.mxu0 0.0
    %71 = vmatprep.subr.mxu0 0.0
    %72 = vmatpush1.msra.mxu0 0.0
    %73 = vmatprep.subr.mxu0 0.0
    %74 = vmatpush1.msra.mxu0 0.0
    %75 = vmatprep.subr.mxu0 0.0
    %76 = vmatpush1.msra.mxu0 0.0
    %77 = vmatprep.subr.mxu0 0.0
    %78 = vmatpush1.msra.mxu0 0.0
    %79 = vmatprep.subr.mxu0 0.0
    %80 = vmatpush1.msra.mxu0 0.0
    %81 = vmatprep.subr.mxu0 0.0
    %82 = vmatpush1.msra.mxu0 0.0
    %83 = vmatprep.subr.mxu0 0.0
    %84 = vmatpush1.msra.mxu0 0.0
    %85 = vmatprep.subr.mxu0 0.0
    %86 = vmatpush1.msra.mxu0 0.0
    %87 = vmatprep.subr.mxu0 0.0
    %88 = vmatpush1.msra.mxu0 0.0
    %89 = vmatprep.subr.mxu0 0.0
    %90 = vmatpush1.msra.mxu0 0.0
    %91 = vmatprep.subr.mxu0 0.0
    %92 = vmatpush1.msra.mxu0 0.0
    %93 = vmatprep.subr.mxu0 0.0
    %94 = vmatpush1.msra.mxu0 0.0
    %95 = vmatprep.subr.mxu0 0.0
    %96 = vmatpush1.msra.mxu0 0.0
    %97 = vmatprep.subr.mxu0 0.0
    %98 = vmatpush1.msra.mxu0 0.0
    %99 = vmatprep.subr.mxu0 0.0
    %100 = vmatpush1.msra.mxu0 0.0
    %101 = vmatprep.subr.mxu0 0.0
    %102 = vmatpush1.msra.mxu0 0.0
    %103 = vmatprep.subr.mxu0 0.0
    %104 = vmatpush1.msra.mxu0 0.0
    %105 = vmatprep.subr.mxu0 0.0
    %106 = vmatpush1.msra.mxu0 0.0
    %107 = vmatprep.subr.mxu0 0.0
    %108 = vmatpush1.msra.mxu0 0.0
    %109 = vmatprep.subr.mxu0 0.0
    %110 = vmatpush1.msra.mxu0 0.0
    %111 = vmatprep.subr.mxu0 0.0
    %112 = vmatpush1.msra.mxu0 0.0
    %113 = vmatprep.subr.mxu0 0.0
    %114 = vmatpush1.msra.mxu0 0.0
    %115 = vmatprep.subr.mxu0 0.0
    %116 = vmatpush1.msra.mxu0 0.0
    %117 = vmatprep.mubr.f32.mxu0 0.0
    %118 = vmatmul.mubr.f32.gmra.mrb[0].mxu0 %v42
    %v119 = vpop.f32.mrb[0].mxu0
    %v120 = vadd.f32 0.0, %v119
    %v121 = vpop.f32.mrb[0].mxu0
    %122 = vmatprep.mubr.f32.mxu0 0.0
    %123 = vmatmul.mubr.f32.gmra.mrb[0].mxu0 %v45
    %v124 = vpop.f32.mrb[0].mxu0
    %v125 = vadd.f32 0.0, %v124
    %v126 = vpop.f32.mrb[0].mxu0
    %127 = vmatprep.mubr.f32.mxu0 0.0
    %128 = vmatmul.mubr.f32.gmra.mrb[0].mxu0 %v48
    %v129 = vpop.f32.mrb[0].mxu0
    %v130 = vadd.f32 0.0, %v129
    %v131 = vpop.f32.mrb[0].mxu0
    %132 = vmatprep.mubr.f32.mxu0 0.0
    %133 = vmatmul.mubr.f32.gmra.mrb[0].mxu0 %v51
    %v134 = vpop.f32.mrb[0].mxu0
    %v135 = vadd.f32 0.0, %v134
    %v136 = vpop.f32.mrb[0].mxu0
    %137 = vdwg.mxu0
    %v138 = vadd.f32 %v24, %v120
    %v139 = vadd.f32 %v25, %v125
    %v140 = vadd.f32 %v26, %v130
    %v141 = vadd.f32 %v27, %v135
    %vm142 = vcmask 261120
    %143 = vst.msk [vmem:[#allocation2] sm:$0xff] %vm142, %v138
    %144 = vst.msk [vmem:[#allocation2 + $0x8] sm:$0xff] %vm142, %v139
    %145 = vst.msk [vmem:[#allocation2 + $0x10] sm:$0xff] %vm142, %v140
    %146 = vst.msk [vmem:[#allocation2 + $0x18] sm:$0xff] %vm142, %v141
    // Predicated region
    $region18: #{cross_attention_forward.7} parent=1 // pred_check
      %p147 = pneg %p15
    $region19: #{cross_attention_forward.7} parent=1 // pred_check_branch
      %149 = sbr.rel (%p147) target = $region21
    $region20: #{cross_attention_forward.7} parent=1 // pred_region
      %v150 = vld [vmem:[#allocation2] sm:$0xff]
      %v151 = vld [vmem:[#allocation2 + $0x8] sm:$0xff]
      %v152 = vld [vmem:[#allocation2 + $0x10] sm:$0xff]
      %v153 = vld [vmem:[#allocation2 + $0x18] sm:$0xff]
      %v154 = vld [vmem:[%s2] sm:$0x1]
      %v156 = vlaneseq
      %v157 = vshrl.u32 %v156, 7
      %v158 = vsub.s32 0, %v157
      %v159 = vrot.slane %v154, %v158
      %v161 = vadd.f32 %v150, %v159
      %v162 = vadd.f32 %v151, %v159
      %v163 = vadd.f32 %v152, %v159
      %v164 = vadd.f32 %v153, %v159
      %165 = vst.msk [vmem:[#allocation3] sm:$0xff] %vm142, %v161
      %166 = vst.msk [vmem:[#allocation3 + $0x8] sm:$0xff] %vm142, %v162
      %167 = vst.msk [vmem:[#allocation3 + $0x10] sm:$0xff] %vm142, %v163
      %168 = vst.msk [vmem:[#allocation3 + $0x18] sm:$0xff] %vm142, %v164
    $region21: #{cross_attention_forward.7} parent=1 // pred_fallthru
      _
    // Predicated region
    $region22: #{cross_attention_forward.7} parent=1 // pred_check
      _
    $region23: #{cross_attention_forward.7} parent=1 // pred_check_branch
      %170 = sbr.rel (0) target = $region25
    $region24: #{cross_attention_forward.7} parent=1 // pred_region
      %s172 = ssub.s32 512, 512
      %173 = vsyncadd [#allocation4], %s172
      %s174 = sshll.u32 [#allocation3], 4
      %s175 = int_to_ptr.vmem [resolvable:$true] %s174
      %180 = dma.vmem_to_hbm [thread:$0]  %s175, 512, %s3, [#allocation4], 128, 128, 8
    $region25: #{cross_attention_forward.7} parent=1 // pred_fallthru
      _
    // Predicated region
    $region26: #{cross_attention_forward.7} parent=1 // pred_check
      _
    $region27: #{cross_attention_forward.7} parent=1 // pred_check_branch
      %182 = sbr.rel (0) target = $region29
    $region28: #{cross_attention_forward.7} parent=1 // pred_region
      %183 = dma.done [#allocation4], 512
    $region29: #{cross_attention_forward.7} parent=1 // pred_fallthru
      _
    %184 = vsyncpa [#allocation4], 1

</llo_original>
